<compile_context>
chip_gen: v7x
topology: tpu7x:2x2x1
jax: 0.10.0
libtpu: 0.0.40
codegen_flags: <defaults>
</compile_context>

<pallas_src>
import functools

import jax
import jax.numpy as jnp
from jax import lax
from jax.experimental import pallas as pl
from jax.experimental.pallas import tpu as pltpu

MATMUL_DTYPE = jnp.bfloat16   # MXU operands; accumulation & BN stay float32
BN_EPS = 1e-5


# ----------------------------------------------------------------------------
# small helpers (host-side, constants only)
# ----------------------------------------------------------------------------
def _same_pad(k):
    # PyTorch Conv2dSamePadding / ZeroPad2d: (before, after) per spatial dim.
    return (k // 2 + (k - 2 * (k // 2)) - 1, k // 2)


def make_bilinear_matrix(n_in, n_out):
    """Interpolation matrix (n_out, n_in) for bilinear upsampling with
    align_corners=True (nn.UpsamplingBilinear2d semantics)."""
    if n_in == 1:
        return jnp.ones((n_out, 1), jnp.float32)
    scale = (n_in - 1) / (n_out - 1)
    src = jnp.arange(n_out, dtype=jnp.float32) * scale
    i0 = jnp.clip(jnp.floor(src).astype(jnp.int32), 0, n_in - 2)
    frac = src - i0.astype(jnp.float32)
    rows = jnp.arange(n_out)
    mat = jnp.zeros((n_out, n_in), jnp.float32)
    mat = mat.at[rows, i0].add(1.0 - frac)
    mat = mat.at[rows, i0 + 1].add(frac)
    return mat


# ----------------------------------------------------------------------------
# fused kernel: grid = (pass, batch_block), both sequential ("arbitrary")
#   pass 0: upsample + 1x1 reduce + pad + kxk conv over implicit concat
#           -> pre-BN y into resident VMEM scratch + BN partial sums
#   pass 1: finish batch stats, fold BN+affine into scale/shift, apply + ReLU
# ----------------------------------------------------------------------------
def _fused_block_kernel(x_ref, skip_ref, br_ref, upk_ref, spad_ref, csel_ref,
                        wtap_ref, gb_ref, o_ref, y_scr, sum_scr, ssq_scr,
                        *, B, Cskip, Cout, kh, kw, W2p, Ls, count, eps):
    p = pl.program_id(0)   # 0 = compute+stats, 1 = BN+ReLU
    j = pl.program_id(1)   # batch block
    cd = MATMUL_DTYPE

    @pl.when(p == 0)
    def _compute_pass():
        @pl.when(j == 0)
        def _init():
            sum_scr[...] = jnp.zeros_like(sum_scr)
            ssq_scr[...] = jnp.zeros_like(ssq_scr)

        # 1x1 channel reduce at LOW resolution (batched via block-diag weight).
        xr = jnp.dot(br_ref[...], x_ref[...],
                     preferred_element_type=jnp.float32)            # (B*Cskip, H*W)
        # bilinear 2x upsample (align_corners=True) + "same" zero-pad, emitted
        # directly in the flat W2p-strided padded-pixel layout (one matmul).
        pu = jnp.dot(xr.astype(cd), upk_ref[...],
                     preferred_element_type=jnp.float32)            # (B*Cskip, Mp)
        # skip connection scattered into the same flat padded layout (0/1
        # matmul => exact, no scratch zero-fill, no masked partial stores).
        ps = jnp.dot(skip_ref[...], spad_ref[...],
                     preferred_element_type=jnp.float32)            # (B*Cskip, Mp)
        ps_all = jnp.concatenate([pu, ps], axis=0).astype(cd)       # (2*B*Cskip, Mp)

        # kh*kw taps: each is ONE contiguous lane slice of the strided layout.
        taps = [ps_all[:, dy * W2p + dx: dy * W2p + dx + Ls]
                for dy in range(kh) for dx in range(kw)]
        t_strided = jnp.concatenate(taps, axis=0)                   # (kh*kw*2*B*Cskip, Ls)
        # crop strided -> clean pixel layout once (0/1 selection => exact).
        t_clean = jnp.dot(t_strided, csel_ref[...],
                          preferred_element_type=jnp.float32).astype(cd)

        # the whole kxk conv over the implicit channel concat: ONE matmul,
        # contraction K = kh*kw*2*B*Cskip, lanes = H2*W2 (lane-dense output).
        y = jnp.dot(wtap_ref[...], t_clean,
                    preferred_element_type=jnp.float32)             # (B*Cout, H2*W2)

        y_scr[j] = y                                                # stays in VMEM

        # exact f32 BatchNorm partials on the same values that get normalized
        rs = jnp.sum(y, axis=1, keepdims=True)                      # (B*Cout, 1)
        rq = jnp.sum(y * y, axis=1, keepdims=True)
        s1 = rs[0:Cout]
        s2 = rq[0:Cout]
        for b in range(1, B):
            s1 = s1 + rs[b * Cout:(b + 1) * Cout]
            s2 = s2 + rq[b * Cout:(b + 1) * Cout]
        sum_scr[...] += s1
        ssq_scr[...] += s2

    @pl.when(p == 1)
    def _bn_relu_pass():
        inv_n = 1.0 / count
        mean = sum_scr[...] * inv_n                                 # (Cout, 1)
        # clamp: single-pass E[y^2]-E[y]^2 can go slightly negative in f32
        var = jnp.maximum(ssq_scr[...] * inv_n - mean * mean, 0.0)
        gamma = gb_ref[:, 0:1]
        beta = gb_ref[:, 1:2]
        scale = gamma * lax.rsqrt(var + eps)
        shift = beta - mean * scale
        scale_b = jnp.tile(scale, (B, 1))                           # (B*Cout, 1)
        shift_b = jnp.tile(shift, (B, 1))
        y = y_scr[j]
        o_ref[...] = jnp.maximum(y * scale_b + shift_b, 0.0)


# ----------------------------------------------------------------------------
# parameters (PyTorch-shaped)
# ----------------------------------------------------------------------------
def init_params(key, n_channels_in, n_skip_channels_in, n_channels_out, kernel_size):
    k1, k2, k3, k4 = jax.random.split(key, 4)
    w_reduce = 0.1 * jax.random.normal(
        k1, (n_skip_channels_in, n_channels_in), jnp.float32)
    w_conv = 0.1 * jax.random.normal(
        k2, (n_channels_out, 2 * n_skip_channels_in, kernel_size, kernel_size),
        jnp.float32)
    gamma = 1.0 + 0.1 * jax.random.normal(k3, (n_channels_out,), jnp.float32)
    beta = 0.1 * jax.random.normal(k4, (n_channels_out,), jnp.float32)
    return dict(w_reduce=w_reduce, w_conv=w_conv, gamma=gamma, beta=beta,
                kernel_size=(kernel_size, kernel_size))


# ----------------------------------------------------------------------------
# forward
# ----------------------------------------------------------------------------
def upsampling_block_forward(x_nchw, x_skip_nchw, params, batch_block=None):
    n, cin, h, w = x_nchw.shape
    _, cskip, h2, w2 = x_skip_nchw.shape
    kh, kw = params["kernel_size"]
    cout = params["gamma"].shape[0]
    cd = MATMUL_DTYPE
    f32 = jnp.float32

    B = n if batch_block is None else batch_block
    assert n % B == 0
    nb = n // B

    pad_top = _same_pad(kh)[0]
    pad_left = _same_pad(kw)[0]
    h2p, w2p = h2 + kh - 1, w2 + kw - 1
    mp = h2p * w2p + (kw - 1)       # flat padded length (+slack so the last tap slice fits)
    ls = h2 * w2p                   # strided tap-slice length
    hw2 = h2 * w2
    ktap = kh * kw * 2 * B * cskip

    # ---- constant matrices (built once on host, fetched into VMEM once) ----
    u_h = make_bilinear_matrix(h, h2)
    u_w = make_bilinear_matrix(w, w2)
    u_h_pad = jnp.zeros((h2p, h), f32).at[pad_top:pad_top + h2].set(u_h)
    u_w_pad = jnp.zeros((w2p, w), f32).at[pad_left:pad_left + w2].set(u_w)
    # upsample + pad -> flat padded pixel layout
    upk = jnp.pad(jnp.kron(u_h_pad, u_w_pad).T, ((0, 0), (0, kw - 1))).astype(cd)
    # skip zero-pad scatter -> same flat padded layout
    eh = jnp.zeros((h2p, h2), f32).at[pad_top:pad_top + h2].set(jnp.eye(h2, dtype=f32))
    ew = jnp.zeros((w2p, w2), f32).at[pad_left:pad_left + w2].set(jnp.eye(w2, dtype=f32))
    spad = jnp.pad(jnp.kron(eh, ew).T, ((0, 0), (0, kw - 1))).astype(cd)
    # strided -> clean pixel crop selection
    csel = jnp.kron(jnp.eye(h2, dtype=f32), jnp.eye(w2p, w2, dtype=f32)).astype(cd)
    # batched block-diag 1x1 reduce
    br = jnp.kron(jnp.eye(B, dtype=f32), params["w_reduce"]).astype(cd)
    # batched block-diag tap weights, column order = (tap, half, image, channel)
    w4 = params["w_conv"].reshape(cout, 2, cskip, kh, kw)
    wt = jnp.transpose(w4, (0, 3, 4, 1, 2)).reshape(cout, kh * kw * 2, cskip)
    wtap = jnp.concatenate(
        [jnp.kron(jnp.eye(B, dtype=f32), wt[:, th, :]) for th in range(kh * kw * 2)],
        axis=1).astype(cd)
    gb = jnp.stack([params["gamma"], params["beta"]], axis=1).astype(f32)   # (Cout, 2)

    # ---- inputs: bf16, channels-first 2D (rows = n*channels, lanes = pixels) ----
    x2d = x_nchw.reshape(n * cin, h * w).astype(cd)
    s2d = x_skip_nchw.reshape(n * cskip, hw2).astype(cd)

    kern = functools.partial(
        _fused_block_kernel, B=B, Cskip=cskip, Cout=cout, kh=kh, kw=kw,
        W2p=w2p, Ls=ls, count=float(n * hw2), eps=BN_EPS)

    out2d = pl.pallas_call(
        kern,
        out_shape=jax.ShapeDtypeStruct((n * cout, hw2), f32),
        grid=(2, nb),
        in_specs=[
            pl.BlockSpec((B * cin, h * w), lambda p, j: ((1 - p) * j, 0)),
            pl.BlockSpec((B * cskip, hw2), lambda p, j: ((1 - p) * j, 0)),
            pl.BlockSpec((B * cskip, B * cin), lambda p, j: (0, 0)),
            pl.BlockSpec((h * w, mp), lambda p, j: (0, 0)),
            pl.BlockSpec((hw2, mp), lambda p, j: (0, 0)),
            pl.BlockSpec((ls, hw2), lambda p, j: (0, 0)),
            pl.BlockSpec((B * cout, ktap), lambda p, j: (0, 0)),
            pl.BlockSpec((cout, 2), lambda p, j: (0, 0)),
        ],
        out_specs=pl.BlockSpec((B * cout, hw2), lambda p, j: (p * j, 0)),
        scratch_shapes=[
            pltpu.VMEM((nb, B * cout, hw2), f32),   # batch-resident pre-BN y
            pltpu.VMEM((cout, 1), f32),             # per-channel sum
            pltpu.VMEM((cout, 1), f32),             # per-channel sum of squares
        ],
        compiler_params=pltpu.CompilerParams(
            dimension_semantics=("arbitrary", "arbitrary")),
    )(x2d, s2d, br, upk, spad, csel, wtap, gb)

    # NOTE: keep f32 out; switch out_shape dtype to bf16 if the consumer allows.
    return out2d.reshape(n, cout, h2, w2)           # NCHW; contiguous reshape (free)


# ----------------------------------------------------------------------------
# pure-JAX f32 reference (exact PyTorch op order) for the correctness check
# ----------------------------------------------------------------------------
def reference_forward(x_nchw, x_skip_nchw, params):
    n, cin, h, w = x_nchw.shape
    _, cskip, h2, w2 = x_skip_nchw.shape
    kh, kw = params["kernel_size"]
    u_h = make_bilinear_matrix(h, h2)
    u_w = make_bilinear_matrix(w, w2)
    x_up = jnp.einsum("oh,pw,nchw->ncop", u_h, u_w, x_nchw)          # upsample
    x_red = jnp.einsum("sc,nchw->nshw", params["w_reduce"], x_up)    # 1x1 conv
    cat = jnp.concatenate([x_red, x_skip_nchw], axis=1)
    (pt, pb) = _same_pad(kh)
    (pleft, pright) = _same_pad(kw)
    padded = jnp.pad(cat, ((0, 0), (0, 0), (pt, pb), (pleft, pright)))
    y = lax.conv_general_dilated(
        padded, params["w_conv"], window_strides=(1, 1), padding="VALID",
        dimension_numbers=("NCHW", "OIHW", "NCHW"))
    mean = jnp.mean(y, axis=(0, 2, 3), keepdims=True)
    var = jnp.mean((y - mean) ** 2, axis=(0, 2, 3), keepdims=True)
    y = (y - mean) * lax.rsqrt(var + BN_EPS)
    y = y * params["gamma"][None, :, None, None] + params["beta"][None, :, None, None]
    return jnp.maximum(y, 0.0)


# ----------------------------------------------------------------------------
if __name__ == "__main__":
    # UpSamplingBlock(n_channels_in=8, n_skip_channels_in=4, n_channels_out=8, kernel_size=3)
    N, CIN, CSKIP, COUT, H, W, K = 2, 8, 4, 8, 8, 8, 3

    key = jax.random.PRNGKey(0)
    kx, ks, kp = jax.random.split(key, 3)
    x = jax.random.normal(kx, (N, CIN, H, W), jnp.float32)                  # NCHW
    x_skip = jax.random.normal(ks, (N, CSKIP, 2 * H, 2 * W), jnp.float32)   # NCHW
    params = init_params(kp, CIN, CSKIP, COUT, K)

    out = jax.block_until_ready(upsampling_block_forward(x, x_skip, params))
    ref = jax.block_until_ready(reference_forward(x, x_skip, params))

    assert out.shape == (N, COUT, 2 * H, 2 * W), out.shape
    max_err = float(jnp.max(jnp.abs(out - ref)))
    mean_err = float(jnp.mean(jnp.abs(out - ref)))
    # bf16 MXU operands (f32 accumulation / BN math) => small bounded error vs f32 ref
    assert max_err < 8e-2, ("max abs err", max_err)
    assert mean_err < 8e-3, ("mean abs err", mean_err)
    print("KERNEL_OK")
</pallas_src>

<mosaic_0001>
module attributes {stable_mosaic.version = 11 : i64} {
  func.func @_fused_block_kernel(%arg0: i32, %arg1: i32, %arg2: memref<16x64xbf16, #tpu.memory_space<vmem>>, %arg3: memref<8x256xbf16, #tpu.memory_space<vmem>>, %arg4: memref<8x16xbf16, #tpu.memory_space<vmem>>, %arg5: memref<64x326xbf16, #tpu.memory_space<vmem>>, %arg6: memref<256x326xbf16, #tpu.memory_space<vmem>>, %arg7: memref<288x256xbf16, #tpu.memory_space<vmem>>, %arg8: memref<16x144xbf16, #tpu.memory_space<vmem>>, %arg9: memref<8x2xf32, #tpu.memory_space<vmem>>, %arg10: memref<16x256xf32, #tpu.memory_space<vmem>>, %arg11: memref<1x16x256xf32, #tpu.memory_space<vmem>>, %arg12: memref<8x1xf32, #tpu.memory_space<vmem>>, %arg13: memref<8x1xf32, #tpu.memory_space<vmem>>) attributes {dimension_semantics = [#tpu.dimension_semantics<arbitrary>, #tpu.dimension_semantics<arbitrary>], iteration_bounds = array<i64: 2, 1>, scalar_prefetch = 0 : i64, scratch_operands = 3 : i64, tpu.core_type = #tpu.core_type<tc>, window_params = [{transform_indices = @transform_0, window_bounds = array<i64: 16, 64>}, {transform_indices = @transform_1, window_bounds = array<i64: 8, 256>}, {pipeline_mode = #tpu.pipeline_mode<synchronous>, transform_indices = @transform_2, window_bounds = array<i64: 8, 16>}, {pipeline_mode = #tpu.pipeline_mode<synchronous>, transform_indices = @transform_3, window_bounds = array<i64: 64, 326>}, {pipeline_mode = #tpu.pipeline_mode<synchronous>, transform_indices = @transform_4, window_bounds = array<i64: 256, 326>}, {pipeline_mode = #tpu.pipeline_mode<synchronous>, transform_indices = @transform_5, window_bounds = array<i64: 288, 256>}, {pipeline_mode = #tpu.pipeline_mode<synchronous>, transform_indices = @transform_6, window_bounds = array<i64: 16, 144>}, {pipeline_mode = #tpu.pipeline_mode<synchronous>, transform_indices = @transform_7, window_bounds = array<i64: 8, 2>}, {transform_indices = @transform_8, window_bounds = array<i64: 16, 256>}]} {
    %c0_i32 = arith.constant 0 : i32
    %0 = arith.cmpi eq, %arg0, %c0_i32 : i32
    %1 = arith.extui %0 : i1 to i32
    %c0_i32_0 = arith.constant 0 : i32
    %2 = arith.cmpi ne, %1, %c0_i32_0 : i32
    scf.if %2 {
      %c0_i32_2 = arith.constant 0 : i32
      %6 = arith.cmpi eq, %arg1, %c0_i32_2 : i32
      %7 = arith.extui %6 : i1 to i32
      %c0_i32_3 = arith.constant 0 : i32
      %8 = arith.cmpi ne, %7, %c0_i32_3 : i32
      scf.if %8 {
        %cst_33 = arith.constant 0.000000e+00 : f32
        %56 = vector.broadcast %cst_33 : f32 to vector<8x1xf32>
        %c0_34 = arith.constant 0 : index
        %c0_35 = arith.constant 0 : index
        %57 = vector.load %arg12[%c0_34, %c0_35] : memref<8x1xf32, #tpu.memory_space<vmem>>, vector<8x1xf32>
        tpu.vector_store %arg12[%c0_34, %c0_35], %56 {strides = array<i32>} : memref<8x1xf32, #tpu.memory_space<vmem>>, vector<8x1xf32>,
        %cst_36 = arith.constant 0.000000e+00 : f32
        %58 = vector.broadcast %cst_36 : f32 to vector<8x1xf32>
        %c0_37 = arith.constant 0 : index
        %c0_38 = arith.constant 0 : index
        %59 = vector.load %arg13[%c0_37, %c0_38] : memref<8x1xf32, #tpu.memory_space<vmem>>, vector<8x1xf32>
        tpu.vector_store %arg13[%c0_37, %c0_38], %58 {strides = array<i32>} : memref<8x1xf32, #tpu.memory_space<vmem>>, vector<8x1xf32>,
      } else {
      }
      %c0 = arith.constant 0 : index
      %c0_4 = arith.constant 0 : index
      %9 = vector.load %arg4[%c0, %c0_4] : memref<8x16xbf16, #tpu.memory_space<vmem>>, vector<8x16xbf16>
      %c0_5 = arith.constant 0 : index
      %c0_6 = arith.constant 0 : index
      %10 = vector.load %arg2[%c0_5, %c0_6] : memref<16x64xbf16, #tpu.memory_space<vmem>>, vector<16x64xbf16>
      %cst = arith.constant dense<0.000000e+00> : vector<8x64xf32>
      %11 = tpu.matmul %9, %10, %cst {dimension_numbers = #tpu.dot_dimension_numbers<[1], [0], [0], [1], [0, 0, 1, 1], [], []>} : vector<8x16xbf16>, vector<16x64xbf16>, vector<8x64xf32> -> vector<8x64xf32>
      %12 = arith.truncf %11 : vector<8x64xf32> to vector<8x64xbf16>
      %c0_7 = arith.constant 0 : index
      %c0_8 = arith.constant 0 : index
      %13 = vector.load %arg5[%c0_7, %c0_8] : memref<64x326xbf16, #tpu.memory_space<vmem>>, vector<64x326xbf16>
      %cst_9 = arith.constant dense<0.000000e+00> : vector<8x326xf32>
      %14 = tpu.matmul %12, %13, %cst_9 {dimension_numbers = #tpu.dot_dimension_numbers<[1], [0], [0], [1], [0, 0, 1, 1], [], []>} : vector<8x64xbf16>, vector<64x326xbf16>, vector<8x326xf32> -> vector<8x326xf32>
      %c0_10 = arith.constant 0 : index
      %c0_11 = arith.constant 0 : index
      %15 = vector.load %arg3[%c0_10, %c0_11] : memref<8x256xbf16, #tpu.memory_space<vmem>>, vector<8x256xbf16>
      %c0_12 = arith.constant 0 : index
      %c0_13 = arith.constant 0 : index
      %16 = vector.load %arg6[%c0_12, %c0_13] : memref<256x326xbf16, #tpu.memory_space<vmem>>, vector<256x326xbf16>
      %cst_14 = arith.constant dense<0.000000e+00> : vector<8x326xf32>
      %17 = tpu.matmul %15, %16, %cst_14 {dimension_numbers = #tpu.dot_dimension_numbers<[1], [0], [0], [1], [0, 0, 1, 1], [], []>} : vector<8x256xbf16>, vector<256x326xbf16>, vector<8x326xf32> -> vector<8x326xf32>
      %18 = tpu.concatenate %14, %17 in 0 : vector<8x326xf32>, vector<8x326xf32> -> vector<16x326xf32>
      %19 = arith.truncf %18 : vector<16x326xf32> to vector<16x326xbf16>
      %20 = vector.extract_strided_slice %19 {offsets = [0, 0], sizes = [16, 288], strides = [1, 1]} : vector<16x326xbf16> to vector<16x288xbf16>
      %21 = vector.extract_strided_slice %19 {offsets = [0, 1], sizes = [16, 288], strides = [1, 1]} : vector<16x326xbf16> to vector<16x288xbf16>
      %22 = vector.extract_strided_slice %19 {offsets = [0, 2], sizes = [16, 288], strides = [1, 1]} : vector<16x326xbf16> to vector<16x288xbf16>
      %23 = vector.extract_strided_slice %19 {offsets = [0, 18], sizes = [16, 288], strides = [1, 1]} : vector<16x326xbf16> to vector<16x288xbf16>
      %24 = vector.extract_strided_slice %19 {offsets = [0, 19], sizes = [16, 288], strides = [1, 1]} : vector<16x326xbf16> to vector<16x288xbf16>
      %25 = vector.extract_strided_slice %19 {offsets = [0, 20], sizes = [16, 288], strides = [1, 1]} : vector<16x326xbf16> to vector<16x288xbf16>
      %26 = vector.extract_strided_slice %19 {offsets = [0, 36], sizes = [16, 288], strides = [1, 1]} : vector<16x326xbf16> to vector<16x288xbf16>
      %27 = vector.extract_strided_slice %19 {offsets = [0, 37], sizes = [16, 288], strides = [1, 1]} : vector<16x326xbf16> to vector<16x288xbf16>
      %28 = vector.extract_strided_slice %19 {offsets = [0, 38], sizes = [16, 288], strides = [1, 1]} : vector<16x326xbf16> to vector<16x288xbf16>
      %29 = tpu.concatenate %20, %21, %22, %23, %24, %25, %26, %27, %28 in 0 : vector<16x288xbf16>, vector<16x288xbf16>, vector<16x288xbf16>, vector<16x288xbf16>, vector<16x288xbf16>, vector<16x288xbf16>, vector<16x288xbf16>, vector<16x288xbf16>, vector<16x288xbf16> -> vector<144x288xbf16>
      %c0_15 = arith.constant 0 : index
      %c0_16 = arith.constant 0 : index
      %30 = vector.load %arg7[%c0_15, %c0_16] : memref<288x256xbf16, #tpu.memory_space<vmem>>, vector<288x256xbf16>
      %cst_17 = arith.constant dense<0.000000e+00> : vector<144x256xf32>
      %31 = tpu.matmul %29, %30, %cst_17 {dimension_numbers = #tpu.dot_dimension_numbers<[1], [0], [0], [1], [0, 0, 1, 1], [], []>} : vector<144x288xbf16>, vector<288x256xbf16>, vector<144x256xf32> -> vector<144x256xf32>
      %32 = arith.truncf %31 : vector<144x256xf32> to vector<144x256xbf16>
      %c0_18 = arith.constant 0 : index
      %c0_19 = arith.constant 0 : index
      %33 = vector.load %arg8[%c0_18, %c0_19] : memref<16x144xbf16, #tpu.memory_space<vmem>>, vector<16x144xbf16>
      %cst_20 = arith.constant dense<0.000000e+00> : vector<16x256xf32>
      %34 = tpu.matmul %33, %32, %cst_20 {dimension_numbers = #tpu.dot_dimension_numbers<[1], [0], [0], [1], [0, 0, 1, 1], [], []>} : vector<16x144xbf16>, vector<144x256xbf16>, vector<16x256xf32> -> vector<16x256xf32>
      %35 = arith.index_cast %arg1 : i32 to index
      %c0_21 = arith.constant 0 : index
      %c0_22 = arith.constant 0 : index
      %36 = vector.load %arg11[%35, %c0_21, %c0_22] : memref<1x16x256xf32, #tpu.memory_space<vmem>>, vector<1x16x256xf32>
      %37 = vector.shape_cast %36 : vector<1x16x256xf32> to vector<16x256xf32>
      %38 = vector.shape_cast %34 : vector<16x256xf32> to vector<1x16x256xf32>
      tpu.vector_store %arg11[%35, %c0_21, %c0_22], %38 {strides = array<i32>} : memref<1x16x256xf32, #tpu.memory_space<vmem>>, vector<1x16x256xf32>,
      %cst_23 = arith.constant dense<0.000000e+00> : vector<16xf32>
      %39 = vector.multi_reduction <add>, %34, %cst_23 [1] : vector<16x256xf32> to vector<16xf32>
      %40 = vector.shape_cast %39 : vector<16xf32> to vector<16x1xf32>
      %41 = arith.mulf %34, %34 : vector<16x256xf32>
      %cst_24 = arith.constant dense<0.000000e+00> : vector<16xf32>
      %42 = vector.multi_reduction <add>, %41, %cst_24 [1] : vector<16x256xf32> to vector<16xf32>
      %43 = vector.shape_cast %42 : vector<16xf32> to vector<16x1xf32>
      %44 = vector.extract_strided_slice %40 {offsets = [0, 0], sizes = [8, 1], strides = [1, 1]} : vector<16x1xf32> to vector<8x1xf32>
      %45 = vector.extract_strided_slice %43 {offsets = [0, 0], sizes = [8, 1], strides = [1, 1]} : vector<16x1xf32> to vector<8x1xf32>
      %46 = vector.extract_strided_slice %40 {offsets = [8, 0], sizes = [8, 1], strides = [1, 1]} : vector<16x1xf32> to vector<8x1xf32>
      %47 = arith.addf %44, %46 : vector<8x1xf32>
      %48 = vector.extract_strided_slice %43 {offsets = [8, 0], sizes = [8, 1], strides = [1, 1]} : vector<16x1xf32> to vector<8x1xf32>
      %49 = arith.addf %45, %48 : vector<8x1xf32>
      %c0_25 = arith.constant 0 : index
      %c0_26 = arith.constant 0 : index
      %50 = vector.load %arg12[%c0_25, %c0_26] : memref<8x1xf32, #tpu.memory_space<vmem>>, vector<8x1xf32>
      %51 = arith.addf %50, %47 : vector<8x1xf32>
      %c0_27 = arith.constant 0 : index
      %c0_28 = arith.constant 0 : index
      %52 = vector.load %arg12[%c0_27, %c0_28] : memref<8x1xf32, #tpu.memory_space<vmem>>, vector<8x1xf32>
      tpu.vector_store %arg12[%c0_27, %c0_28], %51 {strides = array<i32>} : memref<8x1xf32, #tpu.memory_space<vmem>>, vector<8x1xf32>,
      %c0_29 = arith.constant 0 : index
      %c0_30 = arith.constant 0 : index
      %53 = vector.load %arg13[%c0_29, %c0_30] : memref<8x1xf32, #tpu.memory_space<vmem>>, vector<8x1xf32>
      %54 = arith.addf %53, %49 : vector<8x1xf32>
      %c0_31 = arith.constant 0 : index
      %c0_32 = arith.constant 0 : index
      %55 = vector.load %arg13[%c0_31, %c0_32] : memref<8x1xf32, #tpu.memory_space<vmem>>, vector<8x1xf32>
      tpu.vector_store %arg13[%c0_31, %c0_32], %54 {strides = array<i32>} : memref<8x1xf32, #tpu.memory_space<vmem>>, vector<8x1xf32>,
    } else {
    }
    %c1_i32 = arith.constant 1 : i32
    %3 = arith.cmpi eq, %arg0, %c1_i32 : i32
    %4 = arith.extui %3 : i1 to i32
    %c0_i32_1 = arith.constant 0 : i32
    %5 = arith.cmpi ne, %4, %c0_i32_1 : i32
    scf.if %5 {
      %c0 = arith.constant 0 : index
      %c0_2 = arith.constant 0 : index
      %6 = vector.load %arg12[%c0, %c0_2] : memref<8x1xf32, #tpu.memory_space<vmem>>, vector<8x1xf32>
      %cst = arith.constant 0.001953125 : f32
      %7 = vector.broadcast %cst : f32 to vector<8x1xf32>
      %8 = arith.mulf %6, %7 : vector<8x1xf32>
      %c0_3 = arith.constant 0 : index
      %c0_4 = arith.constant 0 : index
      %9 = vector.load %arg13[%c0_3, %c0_4] : memref<8x1xf32, #tpu.memory_space<vmem>>, vector<8x1xf32>
      %cst_5 = arith.constant 0.001953125 : f32
      %10 = vector.broadcast %cst_5 : f32 to vector<8x1xf32>
      %11 = arith.mulf %9, %10 : vector<8x1xf32>
      %12 = arith.mulf %8, %8 : vector<8x1xf32>
      %13 = arith.subf %11, %12 : vector<8x1xf32>
      %cst_6 = arith.constant 0.000000e+00 : f32
      %14 = vector.broadcast %cst_6 : f32 to vector<8x1xf32>
      %15 = arith.maximumf %13, %14 : vector<8x1xf32>
      %c0_7 = arith.constant 0 : index
      %c0_8 = arith.constant 0 : index
      %16 = vector.load %arg9[%c0_7, %c0_8] : memref<8x2xf32, #tpu.memory_space<vmem>>, vector<8x1xf32>
      %c0_9 = arith.constant 0 : index
      %c1 = arith.constant 1 : index
      %17 = vector.load %arg9[%c0_9, %c1] : memref<8x2xf32, #tpu.memory_space<vmem>>, vector<8x1xf32>
      %cst_10 = arith.constant 9.99999974E-6 : f32
      %18 = vector.broadcast %cst_10 : f32 to vector<8x1xf32>
      %19 = arith.addf %15, %18 : vector<8x1xf32>
      %20 = math.rsqrt %19 : vector<8x1xf32>
      %21 = arith.mulf %16, %20 : vector<8x1xf32>
      %22 = arith.mulf %8, %21 : vector<8x1xf32>
      %23 = arith.subf %17, %22 : vector<8x1xf32>
      %24 = tpu.concatenate %21, %21 in 0 : vector<8x1xf32>, vector<8x1xf32> -> vector<16x1xf32>
      %25 = tpu.concatenate %23, %23 in 0 : vector<8x1xf32>, vector<8x1xf32> -> vector<16x1xf32>
      %26 = arith.index_cast %arg1 : i32 to index
      %c0_11 = arith.constant 0 : index
      %c0_12 = arith.constant 0 : index
      %27 = vector.load %arg11[%26, %c0_11, %c0_12] : memref<1x16x256xf32, #tpu.memory_space<vmem>>, vector<1x16x256xf32>
      %28 = vector.shape_cast %27 : vector<1x16x256xf32> to vector<16x256xf32>
      %29 = vector.broadcast %24 : vector<16x1xf32> to vector<16x256xf32>
      %30 = arith.mulf %28, %29 : vector<16x256xf32>
      %31 = vector.broadcast %25 : vector<16x1xf32> to vector<16x256xf32>
      %32 = arith.addf %30, %31 : vector<16x256xf32>
      %cst_13 = arith.constant 0.000000e+00 : f32
      %33 = vector.broadcast %cst_13 : f32 to vector<16x256xf32>
      %34 = arith.maximumf %32, %33 : vector<16x256xf32>
      %c0_14 = arith.constant 0 : index
      %c0_15 = arith.constant 0 : index
      %35 = vector.load %arg10[%c0_14, %c0_15] : memref<16x256xf32, #tpu.memory_space<vmem>>, vector<16x256xf32>
      tpu.vector_store %arg10[%c0_14, %c0_15], %34 {strides = array<i32>} : memref<16x256xf32, #tpu.memory_space<vmem>>, vector<16x256xf32>,
    } else {
    }
    return
  }
  func.func @transform_0(%arg0: i32, %arg1: i32) -> (i32, i32) {
    %c1_i32 = arith.constant 1 : i32
    %0 = arith.subi %c1_i32, %arg0 : i32
    %1 = arith.muli %0, %arg1 : i32
    %c0_i32 = arith.constant 0 : i32
    %c0_i32_0 = arith.constant 0 : i32
    return %1, %c0_i32 : i32, i32
  }
  func.func @transform_1(%arg0: i32, %arg1: i32) -> (i32, i32) {
    %c1_i32 = arith.constant 1 : i32
    %0 = arith.subi %c1_i32, %arg0 : i32
    %1 = arith.muli %0, %arg1 : i32
    %c0_i32 = arith.constant 0 : i32
    %c0_i32_0 = arith.constant 0 : i32
    return %1, %c0_i32 : i32, i32
  }
  func.func @transform_2(%arg0: i32, %arg1: i32) -> (i32, i32) {
    %c0_i32 = arith.constant 0 : i32
    %c0_i32_0 = arith.constant 0 : i32
    %c0_i32_1 = arith.constant 0 : i32
    return %c0_i32, %c0_i32_0 : i32, i32
  }
  func.func @transform_3(%arg0: i32, %arg1: i32) -> (i32, i32) {
    %c0_i32 = arith.constant 0 : i32
    %c0_i32_0 = arith.constant 0 : i32
    %c0_i32_1 = arith.constant 0 : i32
    return %c0_i32, %c0_i32_0 : i32, i32
  }
  func.func @transform_4(%arg0: i32, %arg1: i32) -> (i32, i32) {
    %c0_i32 = arith.constant 0 : i32
    %c0_i32_0 = arith.constant 0 : i32
    %c0_i32_1 = arith.constant 0 : i32
    return %c0_i32, %c0_i32_0 : i32, i32
  }
  func.func @transform_5(%arg0: i32, %arg1: i32) -> (i32, i32) {
    %c0_i32 = arith.constant 0 : i32
    %c0_i32_0 = arith.constant 0 : i32
    %c0_i32_1 = arith.constant 0 : i32
    return %c0_i32, %c0_i32_0 : i32, i32
  }
  func.func @transform_6(%arg0: i32, %arg1: i32) -> (i32, i32) {
    %c0_i32 = arith.constant 0 : i32
    %c0_i32_0 = arith.constant 0 : i32
    %c0_i32_1 = arith.constant 0 : i32
    return %c0_i32, %c0_i32_0 : i32, i32
  }
  func.func @transform_7(%arg0: i32, %arg1: i32) -> (i32, i32) {
    %c0_i32 = arith.constant 0 : i32
    %c0_i32_0 = arith.constant 0 : i32
    %c0_i32_1 = arith.constant 0 : i32
    return %c0_i32, %c0_i32_0 : i32, i32
  }
  func.func @transform_8(%arg0: i32, %arg1: i32) -> (i32, i32) {
    %0 = arith.muli %arg0, %arg1 : i32
    %c0_i32 = arith.constant 0 : i32
    %c0_i32_0 = arith.constant 0 : i32
    return %0, %c0_i32 : i32, i32
  }
}

</mosaic_0001>

<llo_original>
// kernel: tpu_custom_call.1
$region0: #{tpu_custom_call.1}
  #allocation0 [shape = 'u32[]', space=smem, size = 0x4, offset = 0x4, fixed_abs, tag = 'smem constant byte address 0x4 - core index']
  #allocation1 [shape = 'u32[144,128]{1,0:T(1,128)}', space=vmem, size = 0x12000, scoped, tag = 'internal scratch']
  #allocation2 [shape = 'f32[1,16,256]{2,1,0:T(8,128)}', space=vmem, size = 0x4000, scoped, tag = 'scratch operand']
  #allocation3 [shape = 'f32[8,1]{1,0:T(8,128)}', space=vmem, size = 0x1000, scoped, tag = 'scratch operand']
  #allocation4 [shape = 'f32[8,1]{1,0:T(8,128)}', space=vmem, size = 0x1000, scoped, tag = 'scratch operand']
  %s0 = inlined_call_operand.vmem [shape: bf16[16,64], index: 0, kind: input, shape index: {}]
  %s1 = inlined_call_operand.vmem [shape: bf16[8,256], index: 1, kind: input, shape index: {}]
  %s2 = inlined_call_operand.vmem [shape: bf16[8,16], index: 2, kind: input, shape index: {}]
  %s3 = inlined_call_operand.vmem [shape: bf16[64,326], index: 3, kind: input, shape index: {}]
  %s4 = inlined_call_operand.vmem [shape: bf16[256,326], index: 4, kind: input, shape index: {}]
  %s5 = inlined_call_operand.vmem [shape: bf16[288,256], index: 5, kind: input, shape index: {}]
  %s6 = inlined_call_operand.vmem [shape: bf16[16,144], index: 6, kind: input, shape index: {}]
  %s7 = inlined_call_operand.vmem [shape: f32[8,2], index: 7, kind: input, shape index: {}]
  %s8 = inlined_call_operand.hbm [shape: f32[16,256], index: 8, kind: output, shape index: {}]
  %s9 = sld [smem:[#allocation0]]
  $region77: #{tpu_custom_call.1} parent=0
    _
  %s11 = ssub.s32 1, %s9
  %s12 = scalar_select 0, %s11, %s9
  $region1: #{tpu_custom_call.1} parent=0
    #allocation5 [shape = 'u8[32768]{0}', space=vmem, size = 0x8000, scoped, tag = 'output window, operand 0']
    #allocation6 [shape = 's32[2]{0}', space=sflag, size = 0x8, scoped, tag = 'scoped memory for tpu_custom_call.1']
    %13 = vsyncpa [#allocation6], 0
    %s14 = scalar_lea.sflag [#allocation6], 1
    %15 = vsyncpa %s14, 0
    loop: start=0, step=1, limit=4
    $region2: #{tpu_custom_call.1} parent=1 // loop_pre_header
      _
    $region3: #{tpu_custom_call.1} parent=1 // loop_header
      %s17 = sphi 0, %s21
      %p18 = scmp.ge.s32.totalorder %s17, 4
      %s24 = sphi 0, %s36
      %s25 = sphi 0, %s32
      %s26 = sphi 0, %s24
      %s27 = sphi 0, %s25
      %s28 = sphi 0, %s26
      %s29 = sphi 0, %s27
      %s43 = sphi 0, %s45
      %s46 = sphi 0, %s43
      %s47 = sphi 0, %s46
      %s63 = sphi 0, %s47
      %s73 = sphi 0, %s75
      %s76 = sphi 0, %s73
      %s77 = sphi 0, %s76
      %s93 = sphi 0, %s77
      %s97 = sphi 0, %s97
      %s99 = sphi 0, %s97
      %s100 = sphi 0, %s99
      %s114 = sphi 0, %s100
      %s118 = sphi 0, %s118
      %s120 = sphi 0, %s118
      %s121 = sphi 0, %s120
      %s135 = sphi 0, %s121
      %s139 = sphi 0, %s139
      %s141 = sphi 0, %s139
      %s142 = sphi 0, %s141
      %s156 = sphi 0, %s142
      %s160 = sphi 0, %s160
      %s162 = sphi 0, %s160
      %s163 = sphi 0, %s162
      %s177 = sphi 0, %s163
      %s181 = sphi 0, %s181
      %s183 = sphi 0, %s181
      %s184 = sphi 0, %s183
      %s198 = sphi 0, %s184
      %s202 = sphi 0, %s202
      %s204 = sphi 0, %s202
      %s205 = sphi 0, %s204
      %s219 = sphi 0, %s205
      %s227 = sphi 0, %s229
      %s230 = sphi 0, %s227
      %s231 = sphi 0, %s230
      %s247 = sphi 0, %s231
    $region4: #{tpu_custom_call.1} parent=1 // loop_header_branch
      %20 = sbr.rel (%p18) target = $region8
    $region5: #{tpu_custom_call.1} parent=1 // loop_body
      %s22 = ssub.s32 %s17, 1
      %s23 = ssub.s32 %s17, 2
      %s30 = sadd.s32 1, %s25
      %p31 = scmp.ge.s32.totalorder %s30, 1
      %s32 = scalar_select %p31, 0, %s30
      %s33 = sadd.s32 1, %s24
      %s34 = scalar_select %p31, %s33, %s24
      %p35 = scmp.ge.s32.totalorder %s34, 2
      %s36 = scalar_select %p35, 0, %s34
      %s37 = ssub.s32 1, %s24
      %s38 = smul.u32 %s37, %s25
      %s39 = ssub.s32 1, %s36
      %s40 = smul.u32 %s39, %s32
      %s41 = ssub.s32 %s38, %s40
      %p42 = scmp.eq.s32.totalorder %s41, 0
      %s44 = sadd.s32 %s43, 1
      %s45 = scalar_select %p42, %s43, %s44
      %p48 = pneg %p42
      %p49 = scmp.eq.s32.totalorder %s17, 1
      %p50 = por %p48, %p49
      %p51 = scmp.ne.s32.totalorder %s43, %s46
      %p52 = scmp.eq.s32.totalorder %s17, 0
      %p53 = por %p51, %p52
      %p54 = scmp.ne.s32.totalorder %s43, %s46
      %p55 = scmp.eq.s32.totalorder %s22, 1
      %p56 = por %p54, %p55
      %p57 = scmp.ne.s32.totalorder %s46, %s47
      %p58 = scmp.eq.s32.totalorder %s22, 0
      %p59 = por %p57, %p58
      %p60 = scmp.ne.s32.totalorder %s46, %s47
      %p61 = scmp.eq.s32.totalorder %s23, 1
      %p62 = por %p60, %p61
      %p64 = scmp.ne.s32.totalorder %s47, %s63
      %p65 = scmp.eq.s32.totalorder %s23, 0
      %p66 = por %p64, %p65
      %s67 = ssub.s32 1, %s24
      %s68 = smul.u32 %s67, %s25
      %s69 = ssub.s32 1, %s36
      %s70 = smul.u32 %s69, %s32
      %s71 = ssub.s32 %s68, %s70
      %p72 = scmp.eq.s32.totalorder %s71, 0
      %s74 = sadd.s32 %s73, 1
      %s75 = scalar_select %p72, %s73, %s74
      %p78 = pneg %p72
      %p79 = scmp.eq.s32.totalorder %s17, 1
      %p80 = por %p78, %p79
      %p81 = scmp.ne.s32.totalorder %s73, %s76
      %p82 = scmp.eq.s32.totalorder %s17, 0
      %p83 = por %p81, %p82
      %p84 = scmp.ne.s32.totalorder %s73, %s76
      %p85 = scmp.eq.s32.totalorder %s22, 1
      %p86 = por %p84, %p85
      %p87 = scmp.ne.s32.totalorder %s76, %s77
      %p88 = scmp.eq.s32.totalorder %s22, 0
      %p89 = por %p87, %p88
      %p90 = scmp.ne.s32.totalorder %s76, %s77
      %p91 = scmp.eq.s32.totalorder %s23, 1
      %p92 = por %p90, %p91
      %p94 = scmp.ne.s32.totalorder %s77, %s93
      %p95 = scmp.eq.s32.totalorder %s23, 0
      %p96 = por %p94, %p95
      %s98 = sadd.s32 %s97, 1
      %p101 = scmp.eq.s32.totalorder %s17, 1
      %p102 = scmp.ne.s32.totalorder %s97, %s99
      %p103 = scmp.eq.s32.totalorder %s17, 0
      %p104 = por %p102, %p103
      %p105 = scmp.ne.s32.totalorder %s97, %s99
      %p106 = scmp.eq.s32.totalorder %s22, 1
      %p107 = por %p105, %p106
      %p108 = scmp.ne.s32.totalorder %s99, %s100
      %p109 = scmp.eq.s32.totalorder %s22, 0
      %p110 = por %p108, %p109
      %p111 = scmp.ne.s32.totalorder %s99, %s100
      %p112 = scmp.eq.s32.totalorder %s23, 1
      %p113 = por %p111, %p112
      %p115 = scmp.ne.s32.totalorder %s100, %s114
      %p116 = scmp.eq.s32.totalorder %s23, 0
      %p117 = por %p115, %p116
      %s119 = sadd.s32 %s118, 1
      %p122 = scmp.eq.s32.totalorder %s17, 1
      %p123 = scmp.ne.s32.totalorder %s118, %s120
      %p124 = scmp.eq.s32.totalorder %s17, 0
      %p125 = por %p123, %p124
      %p126 = scmp.ne.s32.totalorder %s118, %s120
      %p127 = scmp.eq.s32.totalorder %s22, 1
      %p128 = por %p126, %p127
      %p129 = scmp.ne.s32.totalorder %s120, %s121
      %p130 = scmp.eq.s32.totalorder %s22, 0
      %p131 = por %p129, %p130
      %p132 = scmp.ne.s32.totalorder %s120, %s121
      %p133 = scmp.eq.s32.totalorder %s23, 1
      %p134 = por %p132, %p133
      %p136 = scmp.ne.s32.totalorder %s121, %s135
      %p137 = scmp.eq.s32.totalorder %s23, 0
      %p138 = por %p136, %p137
      %s140 = sadd.s32 %s139, 1
      %p143 = scmp.eq.s32.totalorder %s17, 1
      %p144 = scmp.ne.s32.totalorder %s139, %s141
      %p145 = scmp.eq.s32.totalorder %s17, 0
      %p146 = por %p144, %p145
      %p147 = scmp.ne.s32.totalorder %s139, %s141
      %p148 = scmp.eq.s32.totalorder %s22, 1
      %p149 = por %p147, %p148
      %p150 = scmp.ne.s32.totalorder %s141, %s142
      %p151 = scmp.eq.s32.totalorder %s22, 0
      %p152 = por %p150, %p151
      %p153 = scmp.ne.s32.totalorder %s141, %s142
      %p154 = scmp.eq.s32.totalorder %s23, 1
      %p155 = por %p153, %p154
      %p157 = scmp.ne.s32.totalorder %s142, %s156
      %p158 = scmp.eq.s32.totalorder %s23, 0
      %p159 = por %p157, %p158
      %s161 = sadd.s32 %s160, 1
      %p164 = scmp.eq.s32.totalorder %s17, 1
      %p165 = scmp.ne.s32.totalorder %s160, %s162
      %p166 = scmp.eq.s32.totalorder %s17, 0
      %p167 = por %p165, %p166
      %p168 = scmp.ne.s32.totalorder %s160, %s162
      %p169 = scmp.eq.s32.totalorder %s22, 1
      %p170 = por %p168, %p169
      %p171 = scmp.ne.s32.totalorder %s162, %s163
      %p172 = scmp.eq.s32.totalorder %s22, 0
      %p173 = por %p171, %p172
      %p174 = scmp.ne.s32.totalorder %s162, %s163
      %p175 = scmp.eq.s32.totalorder %s23, 1
      %p176 = por %p174, %p175
      %p178 = scmp.ne.s32.totalorder %s163, %s177
      %p179 = scmp.eq.s32.totalorder %s23, 0
      %p180 = por %p178, %p179
      %s182 = sadd.s32 %s181, 1
      %p185 = scmp.eq.s32.totalorder %s17, 1
      %p186 = scmp.ne.s32.totalorder %s181, %s183
      %p187 = scmp.eq.s32.totalorder %s17, 0
      %p188 = por %p186, %p187
      %p189 = scmp.ne.s32.totalorder %s181, %s183
      %p190 = scmp.eq.s32.totalorder %s22, 1
      %p191 = por %p189, %p190
      %p192 = scmp.ne.s32.totalorder %s183, %s184
      %p193 = scmp.eq.s32.totalorder %s22, 0
      %p194 = por %p192, %p193
      %p195 = scmp.ne.s32.totalorder %s183, %s184
      %p196 = scmp.eq.s32.totalorder %s23, 1
      %p197 = por %p195, %p196
      %p199 = scmp.ne.s32.totalorder %s184, %s198
      %p200 = scmp.eq.s32.totalorder %s23, 0
      %p201 = por %p199, %p200
      %s203 = sadd.s32 %s202, 1
      %p206 = scmp.eq.s32.totalorder %s17, 1
      %p207 = scmp.ne.s32.totalorder %s202, %s204
      %p208 = scmp.eq.s32.totalorder %s17, 0
      %p209 = por %p207, %p208
      %p210 = scmp.ne.s32.totalorder %s202, %s204
      %p211 = scmp.eq.s32.totalorder %s22, 1
      %p212 = por %p210, %p211
      %p213 = scmp.ne.s32.totalorder %s204, %s205
      %p214 = scmp.eq.s32.totalorder %s22, 0
      %p215 = por %p213, %p214
      %p216 = scmp.ne.s32.totalorder %s204, %s205
      %p217 = scmp.eq.s32.totalorder %s23, 1
      %p218 = por %p216, %p217
      %p220 = scmp.ne.s32.totalorder %s205, %s219
      %p221 = scmp.eq.s32.totalorder %s23, 0
      %p222 = por %p220, %p221
      %s223 = smul.u32 %s24, %s25
      %s224 = smul.u32 %s36, %s32
      %s225 = ssub.s32 %s223, %s224
      %p226 = scmp.eq.s32.totalorder %s225, 0
      %s228 = sadd.s32 %s227, 1
      %s229 = scalar_select %p226, %s227, %s228
      %p232 = pneg %p226
      %p233 = scmp.eq.s32.totalorder %s17, 1
      %p234 = por %p232, %p233
      %p235 = scmp.ne.s32.totalorder %s227, %s230
      %p236 = scmp.eq.s32.totalorder %s17, 0
      %p237 = por %p235, %p236
      %p238 = scmp.ne.s32.totalorder %s227, %s230
      %p239 = scmp.eq.s32.totalorder %s22, 1
      %p240 = por %p238, %p239
      %p241 = scmp.ne.s32.totalorder %s230, %s231
      %p242 = scmp.eq.s32.totalorder %s22, 0
      %p243 = por %p241, %p242
      %p244 = scmp.ne.s32.totalorder %s230, %s231
      %p245 = scmp.eq.s32.totalorder %s23, 1
      %p246 = por %p244, %p245
      %p248 = scmp.ne.s32.totalorder %s231, %s247
      %p249 = scmp.eq.s32.totalorder %s23, 0
      %p250 = por %p248, %p249
      %p251 = scmp.le.s32.totalorder 1, %s17
      %p252 = scmp.lt.s32.totalorder %s17, 3
      %p253 = pnand %p251, %p252
      %p254 = pneg %p253
      // Predicated region
      $region9: #{tpu_custom_call.1} parent=5 // pred_check
        _
      $region10: #{tpu_custom_call.1} parent=5 // pred_check_branch
        %256 = sbr.rel (%p253) target = $region12
      $region11: #{tpu_custom_call.1} parent=5 // pred_region
        %s257 = ssub.s32 %s17, 1
        // Predicated region
        $region13: #{tpu_custom_call.1} parent=11 // pred_check
          %p258 = pneg %p110
        $region14: #{tpu_custom_call.1} parent=11 // pred_check_branch
          %260 = sbr.rel (%p258) target = $region16
        $region15: #{tpu_custom_call.1} parent=11 // pred_region
          _
        $region16: #{tpu_custom_call.1} parent=11 // pred_fallthru
          _
        // Predicated region
        $region17: #{tpu_custom_call.1} parent=11 // pred_check
          %p261 = pneg %p131
        $region18: #{tpu_custom_call.1} parent=11 // pred_check_branch
          %263 = sbr.rel (%p261) target = $region20
        $region19: #{tpu_custom_call.1} parent=11 // pred_region
          _
        $region20: #{tpu_custom_call.1} parent=11 // pred_fallthru
          _
        // Predicated region
        $region21: #{tpu_custom_call.1} parent=11 // pred_check
          %p264 = pneg %p152
        $region22: #{tpu_custom_call.1} parent=11 // pred_check_branch
          %266 = sbr.rel (%p264) target = $region24
        $region23: #{tpu_custom_call.1} parent=11 // pred_region
          _
        $region24: #{tpu_custom_call.1} parent=11 // pred_fallthru
          _
        // Predicated region
        $region25: #{tpu_custom_call.1} parent=11 // pred_check
          %p267 = pneg %p173
        $region26: #{tpu_custom_call.1} parent=11 // pred_check_branch
          %269 = sbr.rel (%p267) target = $region28
        $region27: #{tpu_custom_call.1} parent=11 // pred_region
          _
        $region28: #{tpu_custom_call.1} parent=11 // pred_fallthru
          _
        // Predicated region
        $region29: #{tpu_custom_call.1} parent=11 // pred_check
          %p270 = pneg %p194
        $region30: #{tpu_custom_call.1} parent=11 // pred_check_branch
          %272 = sbr.rel (%p270) target = $region32
        $region31: #{tpu_custom_call.1} parent=11 // pred_region
          _
        $region32: #{tpu_custom_call.1} parent=11 // pred_fallthru
          _
        // Predicated region
        $region33: #{tpu_custom_call.1} parent=11 // pred_check
          %p273 = pneg %p215
        $region34: #{tpu_custom_call.1} parent=11 // pred_check_branch
          %275 = sbr.rel (%p273) target = $region36
        $region35: #{tpu_custom_call.1} parent=11 // pred_region
          _
        $region36: #{tpu_custom_call.1} parent=11 // pred_fallthru
          _
      $region12: #{tpu_custom_call.1} parent=5 // pred_fallthru
        _
      %p276 = scmp.lt.s32.totalorder %s17, 2
      // Predicated region
      $region37: #{tpu_custom_call.1} parent=5 // pred_check
        %p277 = pneg %p276
      $region38: #{tpu_custom_call.1} parent=5 // pred_check_branch
        %279 = sbr.rel (%p277) target = $region40
      $region39: #{tpu_custom_call.1} parent=5 // pred_region
        // Predicated region
        $region41: #{tpu_custom_call.1} parent=39 // pred_check
          %p280 = pneg %p53
        $region42: #{tpu_custom_call.1} parent=39 // pred_check_branch
          %282 = sbr.rel (%p280) target = $region44
        $region43: #{tpu_custom_call.1} parent=39 // pred_region
          %s283 = ssub.s32 1, %s24
          %s284 = smul.u32 %s283, %s25
          %s285 = smul.u32 2, %s284
          %p286 = scmp.lt.s32.totalorder %s285, 1
          %s287 = scalar_select %p286, %s285, 1
          %s288 = smul.addr %s287, 4
          %s289 = scalar_lea.vmem %s0, %s288
          %s290 = ssub.s32 1, %s24
          %s291 = smul.u32 %s290, %s25
          %s292 = smul.u32 2, %s291
        $region44: #{tpu_custom_call.1} parent=39 // pred_fallthru
          _
        // Predicated region
        $region45: #{tpu_custom_call.1} parent=39 // pred_check
          %p293 = pneg %p83
        $region46: #{tpu_custom_call.1} parent=39 // pred_check_branch
          %295 = sbr.rel (%p293) target = $region48
        $region47: #{tpu_custom_call.1} parent=39 // pred_region
          %s296 = ssub.s32 1, %s24
          %s297 = smul.u32 %s296, %s25
          %p298 = scmp.lt.s32.totalorder %s297, 0
          %s299 = scalar_select %p298, %s297, 0
          %s300 = smul.addr %s299, 2
          %s301 = smul.addr %s300, 4
          %s302 = scalar_lea.vmem %s1, %s301
          %s303 = ssub.s32 1, %s24
          %s304 = smul.u32 %s303, %s25
        $region48: #{tpu_custom_call.1} parent=39 // pred_fallthru
          _
      $region40: #{tpu_custom_call.1} parent=5 // pred_fallthru
        _
      %p305 = scmp.le.s32.totalorder 1, %s17
      %p306 = scmp.lt.s32.totalorder %s17, 3
      %p307 = pnand %p305, %p306
      %p308 = pneg %p307
      // Predicated region
      $region49: #{tpu_custom_call.1} parent=5 // pred_check
        _
      $region50: #{tpu_custom_call.1} parent=5 // pred_check_branch
        %310 = sbr.rel (%p307) target = $region52
      $region51: #{tpu_custom_call.1} parent=5 // pred_region
        %s311 = ssub.s32 %s17, 1
        %s312 = ssub.s32 1, %s26
        %s313 = smul.u32 %s312, %s27
        %s314 = smul.u32 2, %s313
        %p315 = scmp.lt.s32.totalorder %s314, 1
        %s316 = scalar_select %p315, %s314, 1
        %s317 = smul.addr %s316, 4
        %s318 = scalar_lea.vmem %s0, %s317
        %p319 = pneg %p59
        %p320 = pneg %p56
        %s321 = ssub.s32 1, %s26
        %s322 = smul.u32 %s321, %s27
        %p323 = scmp.lt.s32.totalorder %s322, 0
        %s324 = scalar_select %p323, %s322, 0
        %s325 = smul.addr %s324, 2
        %s326 = smul.addr %s325, 4
        %s327 = scalar_lea.vmem %s1, %s326
        %p328 = pneg %p89
        %p329 = pneg %p86
        %p330 = pneg %p110
        %p331 = pneg %p107
        %p332 = pneg %p131
        %p333 = pneg %p128
        %p334 = pneg %p152
        %p335 = pneg %p149
        %p336 = pneg %p173
        %p337 = pneg %p170
        %p338 = pneg %p194
        %p339 = pneg %p191
        %p340 = pneg %p215
        %p341 = pneg %p212
        %p342 = pneg %p243
        %p343 = pneg %p240
        %s344 = sand.u32 %s230, 1
        %s345 = scalar_lea.sflag [#allocation6], %s344
        %s346 = sand.u32 %s230, 1
        %s347 = smul.addr %s346, 32
        %s348 = scalar_lea.vmem [#allocation5], %s347
        %s349 = ssub.s32 1, %s26
        %s350 = smul.u32 %s349, %s27
        %s351 = smul.u32 2, %s350
        %p352 = scmp.lt.s32.totalorder %s351, 1
        %s353 = scalar_select %p352, %s351, 1
        %s354 = smul.addr %s353, 4
        %s355 = scalar_lea.vmem %s0, %s354
        %s356 = ssub.s32 1, %s26
        %s357 = smul.u32 %s356, %s27
        %s358 = smul.u32 2, %s357
        %s359 = ssub.s32 1, %s26
        %s360 = smul.u32 %s359, %s27
        %p361 = scmp.lt.s32.totalorder %s360, 0
        %s362 = scalar_select %p361, %s360, 0
        %s363 = smul.addr %s362, 2
        %s364 = smul.addr %s363, 4
        %s365 = scalar_lea.vmem %s1, %s364
        %s366 = ssub.s32 1, %s26
        %s367 = smul.u32 %s366, %s27
        %s368 = smul.u32 %s26, %s27
        %s369 = smul.u32 2, %s368
        %p371 = scmp.eq.s32.totalorder %s26, 0
        // Predicated region
        $region53: #{tpu_custom_call.1} parent=51 // pred_check
          %p372 = pneg %p371
        $region54: #{tpu_custom_call.1} parent=51 // pred_check_branch
          %374 = sbr.rel (%p372) target = $region56
        $region55: #{tpu_custom_call.1} parent=51 // pred_region
          %p375 = scmp.eq.s32.totalorder %s27, 0
          // Predicated region
          $region57: #{tpu_custom_call.1} parent=55 // pred_check
            %p376 = pneg %p375
          $region58: #{tpu_custom_call.1} parent=55 // pred_check_branch
            %378 = sbr.rel (%p376) target = $region60
          $region59: #{tpu_custom_call.1} parent=55 // pred_region
            %vm379 = vcmask 7168
            %380 = vst.msk [vmem:[#allocation3] sm:$0xff] %vm379, 0.0
            %381 = vst.msk [vmem:[#allocation4] sm:$0xff] %vm379, 0.0
          $region60: #{tpu_custom_call.1} parent=55 // pred_fallthru
            _
          %v382 = vld [vmem:[%s2] sm:$0xf]
          %v383 = vld [vmem:[%s355] sm:$0xf]
          %v384 = vld [vmem:[%s355 + $0x4] sm:$0xf]
          %v387 = vunpack.c.l.b16 %v383
          %v388 = vunpack.c.l.b16 %v384
          %v389 = vpack.c.b16 %v388, %v387
          %vm391 = vcmask 130048
          %v393 = vsel %vm391, %v382, 0
          %395 = vmatprep.subr.bf16.mxu0 0
          %396 = vmatpush1.bf16.msra.mxu0 %v389
          %397 = vmatprep.subr.bf16.mxu0 0
          %398 = vmatpush1.bf16.msra.mxu0 0
          %399 = vmatprep.subr.bf16.mxu0 0
          %400 = vmatpush1.bf16.msra.mxu0 0
          %401 = vmatprep.subr.bf16.mxu0 0
          %402 = vmatpush1.bf16.msra.mxu0 0
          %403 = vmatprep.subr.bf16.mxu0 0
          %404 = vmatpush1.bf16.msra.mxu0 0
          %405 = vmatprep.subr.bf16.mxu0 0
          %406 = vmatpush1.bf16.msra.mxu0 0
          %407 = vmatprep.subr.bf16.mxu0 0
          %408 = vmatpush1.bf16.msra.mxu0 0
          %409 = vmatprep.subr.bf16.mxu0 0
          %410 = vmatpush1.bf16.msra.mxu0 0
          %411 = vmatprep.subr.bf16.mxu0 0
          %412 = vmatpush1.bf16.msra.mxu0 0
          %413 = vmatprep.subr.bf16.mxu0 0
          %414 = vmatpush1.bf16.msra.mxu0 0
          %415 = vmatprep.subr.bf16.mxu0 0
          %416 = vmatpush1.bf16.msra.mxu0 0
          %417 = vmatprep.subr.bf16.mxu0 0
          %418 = vmatpush1.bf16.msra.mxu0 0
          %419 = vmatprep.subr.bf16.mxu0 0
          %420 = vmatpush1.bf16.msra.mxu0 0
          %421 = vmatprep.subr.bf16.mxu0 0
          %422 = vmatpush1.bf16.msra.mxu0 0
          %423 = vmatprep.subr.bf16.mxu0 0
          %424 = vmatpush1.bf16.msra.mxu0 0
          %425 = vmatprep.subr.bf16.mxu0 0
          %426 = vmatpush1.bf16.msra.mxu0 0
          %427 = vmatprep.mubr.bf16.mxu0 0
          %428 = vmatmul.mubr.bf16.gmra.mrb[0].mxu0 %v393
          %v429 = vpop.f32.mrb[0].mxu0
          %v430 = vadd.f32 0.0, %v429
          %v431 = vpop.f32.mrb[0].mxu0
          %v432 = vpop.f32.mrb[0].mxu0
          %v433 = vpop.f32.mrb[0].mxu0
          %434 = vdwg.mxu0
          %v435 = vpack.c.bf16 %v430, %v430
          %v436 = vld [vmem:[%s3] sm:$0xff]
          %v437 = vld [vmem:[%s3 + $0x8] sm:$0xf]
          %v438 = vld [vmem:[%s3 + $0xc] sm:$0xff]
          %v439 = vld [vmem:[%s3 + $0x14] sm:$0xf]
          %v440 = vld [vmem:[%s3 + $0x18] sm:$0xff]
          %v441 = vld [vmem:[%s3 + $0x20] sm:$0xf]
          %v442 = vld [vmem:[%s3 + $0x24] sm:$0xff]
          %v443 = vld [vmem:[%s3 + $0x2c] sm:$0xf]
          %v444 = vld [vmem:[%s3 + $0x30] sm:$0xff]
          %v445 = vld [vmem:[%s3 + $0x38] sm:$0xf]
          %v446 = vld [vmem:[%s3 + $0x3c] sm:$0xff]
          %v447 = vld [vmem:[%s3 + $0x44] sm:$0xf]
          %v448 = vld [vmem:[%s3 + $0x48] sm:$0xff]
          %v449 = vld [vmem:[%s3 + $0x50] sm:$0xf]
          %v450 = vld [vmem:[%s3 + $0x54] sm:$0xff]
          %v451 = vld [vmem:[%s3 + $0x5c] sm:$0xf]
          %v468 = vunpack.c.l.b16 %v436
          %v469 = vunpack.c.h.b16 %v436
          %v470 = vunpack.c.l.b16 %v437
          %v471 = vunpack.c.l.b16 %v438
          %v472 = vunpack.c.h.b16 %v438
          %v473 = vunpack.c.l.b16 %v439
          %v474 = vunpack.c.l.b16 %v440
          %v475 = vunpack.c.h.b16 %v440
          %v476 = vunpack.c.l.b16 %v441
          %v477 = vunpack.c.l.b16 %v442
          %v478 = vunpack.c.h.b16 %v442
          %v479 = vunpack.c.l.b16 %v443
          %v480 = vunpack.c.l.b16 %v444
          %v481 = vunpack.c.h.b16 %v444
          %v482 = vunpack.c.l.b16 %v445
          %v483 = vunpack.c.l.b16 %v446
          %v484 = vunpack.c.h.b16 %v446
          %v485 = vunpack.c.l.b16 %v447
          %v486 = vunpack.c.l.b16 %v448
          %v487 = vunpack.c.h.b16 %v448
          %v488 = vunpack.c.l.b16 %v449
          %v489 = vunpack.c.l.b16 %v450
          %v490 = vunpack.c.h.b16 %v450
          %v491 = vunpack.c.l.b16 %v451
          %v492 = vpack.c.b16 %v471, %v468
          %v493 = vpack.c.b16 %v472, %v469
          %v494 = vpack.c.b16 %v473, %v470
          %v495 = vpack.c.b16 %v477, %v474
          %v496 = vpack.c.b16 %v478, %v475
          %v497 = vpack.c.b16 %v479, %v476
          %v498 = vpack.c.b16 %v483, %v480
          %v499 = vpack.c.b16 %v484, %v481
          %v500 = vpack.c.b16 %v485, %v482
          %v501 = vpack.c.b16 %v489, %v486
          %v502 = vpack.c.b16 %v490, %v487
          %v503 = vpack.c.b16 %v491, %v488
          %vm516 = vcmask 523264
          %v518 = vsel %vm516, %v435, 0
          %520 = vmatprep.subr.bf16.mxu0 %v493
          %521 = vmatpush1.bf16.msra.mxu0 %v492
          %522 = vmatprep.subr.bf16.mxu0 %v496
          %523 = vmatpush1.bf16.msra.mxu0 %v495
          %524 = vmatprep.subr.bf16.mxu0 %v499
          %525 = vmatpush1.bf16.msra.mxu0 %v498
          %526 = vmatprep.subr.bf16.mxu0 %v502
          %527 = vmatpush1.bf16.msra.mxu0 %v501
          %528 = vmatprep.subr.bf16.mxu0 0
          %529 = vmatpush1.bf16.msra.mxu0 0
          %530 = vmatprep.subr.bf16.mxu0 0
          %531 = vmatpush1.bf16.msra.mxu0 0
          %532 = vmatprep.subr.bf16.mxu0 0
          %533 = vmatpush1.bf16.msra.mxu0 0
          %534 = vmatprep.subr.bf16.mxu0 0
          %535 = vmatpush1.bf16.msra.mxu0 0
          %536 = vmatprep.subr.bf16.mxu0 0
          %537 = vmatpush1.bf16.msra.mxu0 0
          %538 = vmatprep.subr.bf16.mxu0 0
          %539 = vmatpush1.bf16.msra.mxu0 0
          %540 = vmatprep.subr.bf16.mxu0 0
          %541 = vmatpush1.bf16.msra.mxu0 0
          %542 = vmatprep.subr.bf16.mxu0 0
          %543 = vmatpush1.bf16.msra.mxu0 0
          %544 = vmatprep.subr.bf16.mxu0 0
          %545 = vmatpush1.bf16.msra.mxu0 0
          %546 = vmatprep.subr.bf16.mxu0 0
          %547 = vmatpush1.bf16.msra.mxu0 0
          %548 = vmatprep.subr.bf16.mxu0 0
          %549 = vmatpush1.bf16.msra.mxu0 0
          %550 = vmatprep.subr.bf16.mxu0 0
          %551 = vmatpush1.bf16.msra.mxu0 0
          %552 = vmatprep.mubr.bf16.mxu0 0
          %553 = vmatmul.mubr.bf16.gmra.mrb[0].mxu0 %v518
          %v554 = vpop.f32.mrb[0].mxu0
          %v555 = vadd.f32 0.0, %v554
          %v556 = vpop.f32.mrb[0].mxu0
          %v557 = vadd.f32 0.0, %v556
          %v558 = vpop.f32.mrb[0].mxu0
          %v559 = vpop.f32.mrb[0].mxu0
          %560 = vdwg.mxu0
          %561 = vmatprep.subr.bf16.mxu0 0
          %562 = vmatpush1.bf16.msra.mxu0 %v494
          %563 = vmatprep.subr.bf16.mxu0 0
          %564 = vmatpush1.bf16.msra.mxu0 %v497
          %565 = vmatprep.subr.bf16.mxu0 0
          %566 = vmatpush1.bf16.msra.mxu0 %v500
          %567 = vmatprep.subr.bf16.mxu0 0
          %568 = vmatpush1.bf16.msra.mxu0 %v503
          %569 = vmatprep.subr.bf16.mxu0 0
          %570 = vmatpush1.bf16.msra.mxu0 0
          %571 = vmatprep.subr.bf16.mxu0 0
          %572 = vmatpush1.bf16.msra.mxu0 0
          %573 = vmatprep.subr.bf16.mxu0 0
          %574 = vmatpush1.bf16.msra.mxu0 0
          %575 = vmatprep.subr.bf16.mxu0 0
          %576 = vmatpush1.bf16.msra.mxu0 0
          %577 = vmatprep.subr.bf16.mxu0 0
          %578 = vmatpush1.bf16.msra.mxu0 0
          %579 = vmatprep.subr.bf16.mxu0 0
          %580 = vmatpush1.bf16.msra.mxu0 0
          %581 = vmatprep.subr.bf16.mxu0 0
          %582 = vmatpush1.bf16.msra.mxu0 0
          %583 = vmatprep.subr.bf16.mxu0 0
          %584 = vmatpush1.bf16.msra.mxu0 0
          %585 = vmatprep.subr.bf16.mxu0 0
          %586 = vmatpush1.bf16.msra.mxu0 0
          %587 = vmatprep.subr.bf16.mxu0 0
          %588 = vmatpush1.bf16.msra.mxu0 0
          %589 = vmatprep.subr.bf16.mxu0 0
          %590 = vmatpush1.bf16.msra.mxu0 0
          %591 = vmatprep.subr.bf16.mxu0 0
          %592 = vmatpush1.bf16.msra.mxu0 0
          %593 = vmatprep.mubr.bf16.mxu0 0
          %594 = vmatmul.mubr.bf16.gmra.mrb[0].mxu0 %v518
          %v595 = vpop.f32.mrb[0].mxu0
          %v596 = vadd.f32 0.0, %v595
          %v597 = vpop.f32.mrb[0].mxu0
          %v598 = vpop.f32.mrb[0].mxu0
          %v599 = vpop.f32.mrb[0].mxu0
          %600 = vdwg.mxu0
          %v601 = vld [vmem:[%s365] sm:$0xff]
          %v602 = vld [vmem:[%s4] sm:$0xff]
          %v603 = vld [vmem:[%s4 + $0x8] sm:$0xf]
          %v604 = vld [vmem:[%s4 + $0xc] sm:$0xff]
          %v605 = vld [vmem:[%s4 + $0x14] sm:$0xf]
          %v606 = vld [vmem:[%s4 + $0x18] sm:$0xff]
          %v607 = vld [vmem:[%s4 + $0x20] sm:$0xf]
          %v608 = vld [vmem:[%s4 + $0x24] sm:$0xff]
          %v609 = vld [vmem:[%s4 + $0x2c] sm:$0xf]
          %v610 = vld [vmem:[%s4 + $0x30] sm:$0xff]
          %v611 = vld [vmem:[%s4 + $0x38] sm:$0xf]
          %v612 = vld [vmem:[%s4 + $0x3c] sm:$0xff]
          %v613 = vld [vmem:[%s4 + $0x44] sm:$0xf]
          %v614 = vld [vmem:[%s4 + $0x48] sm:$0xff]
          %v615 = vld [vmem:[%s4 + $0x50] sm:$0xf]
          %v616 = vld [vmem:[%s4 + $0x54] sm:$0xff]
          %v617 = vld [vmem:[%s4 + $0x5c] sm:$0xf]
          %v618 = vld [vmem:[%s4 + $0x60] sm:$0xff]
          %v619 = vld [vmem:[%s4 + $0x68] sm:$0xf]
          %v620 = vld [vmem:[%s4 + $0x6c] sm:$0xff]
          %v621 = vld [vmem:[%s4 + $0x74] sm:$0xf]
          %v622 = vld [vmem:[%s4 + $0x78] sm:$0xff]
          %v623 = vld [vmem:[%s4 + $0x80] sm:$0xf]
          %v624 = vld [vmem:[%s4 + $0x84] sm:$0xff]
          %v625 = vld [vmem:[%s4 + $0x8c] sm:$0xf]
          %v626 = vld [vmem:[%s4 + $0x90] sm:$0xff]
          %v627 = vld [vmem:[%s4 + $0x98] sm:$0xf]
          %v628 = vld [vmem:[%s4 + $0x9c] sm:$0xff]
          %v629 = vld [vmem:[%s4 + $0xa4] sm:$0xf]
          %v630 = vld [vmem:[%s4 + $0xa8] sm:$0xff]
          %v631 = vld [vmem:[%s4 + $0xb0] sm:$0xf]
          %v632 = vld [vmem:[%s4 + $0xb4] sm:$0xff]
          %v633 = vld [vmem:[%s4 + $0xbc] sm:$0xf]
          %v634 = vld [vmem:[%s4 + $0xc0] sm:$0xff]
          %v635 = vld [vmem:[%s4 + $0xc8] sm:$0xf]
          %v636 = vld [vmem:[%s4 + $0xcc] sm:$0xff]
          %v637 = vld [vmem:[%s4 + $0xd4] sm:$0xf]
          %v638 = vld [vmem:[%s4 + $0xd8] sm:$0xff]
          %v639 = vld [vmem:[%s4 + $0xe0] sm:$0xf]
          %v640 = vld [vmem:[%s4 + $0xe4] sm:$0xff]
          %v641 = vld [vmem:[%s4 + $0xec] sm:$0xf]
          %v642 = vld [vmem:[%s4 + $0xf0] sm:$0xff]
          %v643 = vld [vmem:[%s4 + $0xf8] sm:$0xf]
          %v644 = vld [vmem:[%s4 + $0xfc] sm:$0xff]
          %v645 = vld [vmem:[%s4 + $0x104] sm:$0xf]
          %v646 = vld [vmem:[%s4 + $0x108] sm:$0xff]
          %v647 = vld [vmem:[%s4 + $0x110] sm:$0xf]
          %v648 = vld [vmem:[%s4 + $0x114] sm:$0xff]
          %v649 = vld [vmem:[%s4 + $0x11c] sm:$0xf]
          %v650 = vld [vmem:[%s4 + $0x120] sm:$0xff]
          %v651 = vld [vmem:[%s4 + $0x128] sm:$0xf]
          %v652 = vld [vmem:[%s4 + $0x12c] sm:$0xff]
          %v653 = vld [vmem:[%s4 + $0x134] sm:$0xf]
          %v654 = vld [vmem:[%s4 + $0x138] sm:$0xff]
          %v655 = vld [vmem:[%s4 + $0x140] sm:$0xf]
          %v656 = vld [vmem:[%s4 + $0x144] sm:$0xff]
          %v657 = vld [vmem:[%s4 + $0x14c] sm:$0xf]
          %v658 = vld [vmem:[%s4 + $0x150] sm:$0xff]
          %v659 = vld [vmem:[%s4 + $0x158] sm:$0xf]
          %v660 = vld [vmem:[%s4 + $0x15c] sm:$0xff]
          %v661 = vld [vmem:[%s4 + $0x164] sm:$0xf]
          %v662 = vld [vmem:[%s4 + $0x168] sm:$0xff]
          %v663 = vld [vmem:[%s4 + $0x170] sm:$0xf]
          %v664 = vld [vmem:[%s4 + $0x174] sm:$0xff]
          %v665 = vld [vmem:[%s4 + $0x17c] sm:$0xf]
          %v667 = vunpack.c.l.b16 %v601
          %v668 = vunpack.c.h.b16 %v601
          %v669 = vpack.c.b16 %v667, %v667
          %v670 = vpack.c.b16 %v668, %v668
          %v737 = vunpack.c.l.b16 %v602
          %v738 = vunpack.c.h.b16 %v602
          %v739 = vunpack.c.l.b16 %v603
          %v740 = vunpack.c.l.b16 %v604
          %v741 = vunpack.c.h.b16 %v604
          %v742 = vunpack.c.l.b16 %v605
          %v743 = vunpack.c.l.b16 %v606
          %v744 = vunpack.c.h.b16 %v606
          %v745 = vunpack.c.l.b16 %v607
          %v746 = vunpack.c.l.b16 %v608
          %v747 = vunpack.c.h.b16 %v608
          %v748 = vunpack.c.l.b16 %v609
          %v749 = vunpack.c.l.b16 %v610
          %v750 = vunpack.c.h.b16 %v610
          %v751 = vunpack.c.l.b16 %v611
          %v752 = vunpack.c.l.b16 %v612
          %v753 = vunpack.c.h.b16 %v612
          %v754 = vunpack.c.l.b16 %v613
          %v755 = vunpack.c.l.b16 %v614
          %v756 = vunpack.c.h.b16 %v614
          %v757 = vunpack.c.l.b16 %v615
          %v758 = vunpack.c.l.b16 %v616
          %v759 = vunpack.c.h.b16 %v616
          %v760 = vunpack.c.l.b16 %v617
          %v761 = vunpack.c.l.b16 %v618
          %v762 = vunpack.c.h.b16 %v618
          %v763 = vunpack.c.l.b16 %v619
          %v764 = vunpack.c.l.b16 %v620
          %v765 = vunpack.c.h.b16 %v620
          %v766 = vunpack.c.l.b16 %v621
          %v767 = vunpack.c.l.b16 %v622
          %v768 = vunpack.c.h.b16 %v622
          %v769 = vunpack.c.l.b16 %v623
          %v770 = vunpack.c.l.b16 %v624
          %v771 = vunpack.c.h.b16 %v624
          %v772 = vunpack.c.l.b16 %v625
          %v773 = vunpack.c.l.b16 %v626
          %v774 = vunpack.c.h.b16 %v626
          %v775 = vunpack.c.l.b16 %v627
          %v776 = vunpack.c.l.b16 %v628
          %v777 = vunpack.c.h.b16 %v628
          %v778 = vunpack.c.l.b16 %v629
          %v779 = vunpack.c.l.b16 %v630
          %v780 = vunpack.c.h.b16 %v630
          %v781 = vunpack.c.l.b16 %v631
          %v782 = vunpack.c.l.b16 %v632
          %v783 = vunpack.c.h.b16 %v632
          %v784 = vunpack.c.l.b16 %v633
          %v785 = vunpack.c.l.b16 %v634
          %v786 = vunpack.c.h.b16 %v634
          %v787 = vunpack.c.l.b16 %v635
          %v788 = vunpack.c.l.b16 %v636
          %v789 = vunpack.c.h.b16 %v636
          %v790 = vunpack.c.l.b16 %v637
          %v791 = vunpack.c.l.b16 %v638
          %v792 = vunpack.c.h.b16 %v638
          %v793 = vunpack.c.l.b16 %v639
          %v794 = vunpack.c.l.b16 %v640
          %v795 = vunpack.c.h.b16 %v640
          %v796 = vunpack.c.l.b16 %v641
          %v797 = vunpack.c.l.b16 %v642
          %v798 = vunpack.c.h.b16 %v642
          %v799 = vunpack.c.l.b16 %v643
          %v800 = vunpack.c.l.b16 %v644
          %v801 = vunpack.c.h.b16 %v644
          %v802 = vunpack.c.l.b16 %v645
          %v803 = vunpack.c.l.b16 %v646
          %v804 = vunpack.c.h.b16 %v646
          %v805 = vunpack.c.l.b16 %v647
          %v806 = vunpack.c.l.b16 %v648
          %v807 = vunpack.c.h.b16 %v648
          %v808 = vunpack.c.l.b16 %v649
          %v809 = vunpack.c.l.b16 %v650
          %v810 = vunpack.c.h.b16 %v650
          %v811 = vunpack.c.l.b16 %v651
          %v812 = vunpack.c.l.b16 %v652
          %v813 = vunpack.c.h.b16 %v652
          %v814 = vunpack.c.l.b16 %v653
          %v815 = vunpack.c.l.b16 %v654
          %v816 = vunpack.c.h.b16 %v654
          %v817 = vunpack.c.l.b16 %v655
          %v818 = vunpack.c.l.b16 %v656
          %v819 = vunpack.c.h.b16 %v656
          %v820 = vunpack.c.l.b16 %v657
          %v821 = vunpack.c.l.b16 %v658
          %v822 = vunpack.c.h.b16 %v658
          %v823 = vunpack.c.l.b16 %v659
          %v824 = vunpack.c.l.b16 %v660
          %v825 = vunpack.c.h.b16 %v660
          %v826 = vunpack.c.l.b16 %v661
          %v827 = vunpack.c.l.b16 %v662
          %v828 = vunpack.c.h.b16 %v662
          %v829 = vunpack.c.l.b16 %v663
          %v830 = vunpack.c.l.b16 %v664
          %v831 = vunpack.c.h.b16 %v664
          %v832 = vunpack.c.l.b16 %v665
          %v833 = vpack.c.b16 %v740, %v737
          %v834 = vpack.c.b16 %v741, %v738
          %v835 = vpack.c.b16 %v742, %v739
          %v836 = vpack.c.b16 %v746, %v743
          %v837 = vpack.c.b16 %v747, %v744
          %v838 = vpack.c.b16 %v748, %v745
          %v839 = vpack.c.b16 %v752, %v749
          %v840 = vpack.c.b16 %v753, %v750
          %v841 = vpack.c.b16 %v754, %v751
          %v842 = vpack.c.b16 %v758, %v755
          %v843 = vpack.c.b16 %v759, %v756
          %v844 = vpack.c.b16 %v760, %v757
          %v845 = vpack.c.b16 %v764, %v761
          %v846 = vpack.c.b16 %v765, %v762
          %v847 = vpack.c.b16 %v766, %v763
          %v848 = vpack.c.b16 %v770, %v767
          %v849 = vpack.c.b16 %v771, %v768
          %v850 = vpack.c.b16 %v772, %v769
          %v851 = vpack.c.b16 %v776, %v773
          %v852 = vpack.c.b16 %v777, %v774
          %v853 = vpack.c.b16 %v778, %v775
          %v854 = vpack.c.b16 %v782, %v779
          %v855 = vpack.c.b16 %v783, %v780
          %v856 = vpack.c.b16 %v784, %v781
          %v857 = vpack.c.b16 %v788, %v785
          %v858 = vpack.c.b16 %v789, %v786
          %v859 = vpack.c.b16 %v790, %v787
          %v860 = vpack.c.b16 %v794, %v791
          %v861 = vpack.c.b16 %v795, %v792
          %v862 = vpack.c.b16 %v796, %v793
          %v863 = vpack.c.b16 %v800, %v797
          %v864 = vpack.c.b16 %v801, %v798
          %v865 = vpack.c.b16 %v802, %v799
          %v866 = vpack.c.b16 %v806, %v803
          %v867 = vpack.c.b16 %v807, %v804
          %v868 = vpack.c.b16 %v808, %v805
          %v869 = vpack.c.b16 %v812, %v809
          %v870 = vpack.c.b16 %v813, %v810
          %v871 = vpack.c.b16 %v814, %v811
          %v872 = vpack.c.b16 %v818, %v815
          %v873 = vpack.c.b16 %v819, %v816
          %v874 = vpack.c.b16 %v820, %v817
          %v875 = vpack.c.b16 %v824, %v821
          %v876 = vpack.c.b16 %v825, %v822
          %v877 = vpack.c.b16 %v826, %v823
          %v878 = vpack.c.b16 %v830, %v827
          %v879 = vpack.c.b16 %v831, %v828
          %v880 = vpack.c.b16 %v832, %v829
          %929 = vmatprep.subr.bf16.mxu0 %v834
          %930 = vmatpush1.bf16.msra.mxu0 %v833
          %931 = vmatprep.subr.bf16.mxu0 %v837
          %932 = vmatpush1.bf16.msra.mxu0 %v836
          %933 = vmatprep.subr.bf16.mxu0 %v840
          %934 = vmatpush1.bf16.msra.mxu0 %v839
          %935 = vmatprep.subr.bf16.mxu0 %v843
          %936 = vmatpush1.bf16.msra.mxu0 %v842
          %937 = vmatprep.subr.bf16.mxu0 %v846
          %938 = vmatpush1.bf16.msra.mxu0 %v845
          %939 = vmatprep.subr.bf16.mxu0 %v849
          %940 = vmatpush1.bf16.msra.mxu0 %v848
          %941 = vmatprep.subr.bf16.mxu0 %v852
          %942 = vmatpush1.bf16.msra.mxu0 %v851
          %943 = vmatprep.subr.bf16.mxu0 %v855
          %944 = vmatpush1.bf16.msra.mxu0 %v854
          %945 = vmatprep.subr.bf16.mxu0 %v858
          %946 = vmatpush1.bf16.msra.mxu0 %v857
          %947 = vmatprep.subr.bf16.mxu0 %v861
          %948 = vmatpush1.bf16.msra.mxu0 %v860
          %949 = vmatprep.subr.bf16.mxu0 %v864
          %950 = vmatpush1.bf16.msra.mxu0 %v863
          %951 = vmatprep.subr.bf16.mxu0 %v867
          %952 = vmatpush1.bf16.msra.mxu0 %v866
          %953 = vmatprep.subr.bf16.mxu0 %v870
          %954 = vmatpush1.bf16.msra.mxu0 %v869
          %955 = vmatprep.subr.bf16.mxu0 %v873
          %956 = vmatpush1.bf16.msra.mxu0 %v872
          %957 = vmatprep.subr.bf16.mxu0 %v876
          %958 = vmatpush1.bf16.msra.mxu0 %v875
          %959 = vmatprep.subr.bf16.mxu0 %v879
          %960 = vmatpush1.bf16.msra.mxu0 %v878
          %961 = vmatprep.mubr.bf16.mxu0 %v670
          %962 = vmatmul.mubr.bf16.gmra.mrb[0].mxu0 %v669
          %v963 = vpop.f32.mrb[0].mxu0
          %v964 = vadd.f32 0.0, %v963
          %v965 = vpop.f32.mrb[0].mxu0
          %v966 = vadd.f32 0.0, %v965
          %v967 = vpop.f32.mrb[0].mxu0
          %v968 = vpop.f32.mrb[0].mxu0
          %969 = vdwg.mxu0
          %970 = vmatprep.subr.bf16.mxu0 0
          %971 = vmatpush1.bf16.msra.mxu0 %v835
          %972 = vmatprep.subr.bf16.mxu0 0
          %973 = vmatpush1.bf16.msra.mxu0 %v838
          %974 = vmatprep.subr.bf16.mxu0 0
          %975 = vmatpush1.bf16.msra.mxu0 %v841
          %976 = vmatprep.subr.bf16.mxu0 0
          %977 = vmatpush1.bf16.msra.mxu0 %v844
          %978 = vmatprep.subr.bf16.mxu0 0
          %979 = vmatpush1.bf16.msra.mxu0 %v847
          %980 = vmatprep.subr.bf16.mxu0 0
          %981 = vmatpush1.bf16.msra.mxu0 %v850
          %982 = vmatprep.subr.bf16.mxu0 0
          %983 = vmatpush1.bf16.msra.mxu0 %v853
          %984 = vmatprep.subr.bf16.mxu0 0
          %985 = vmatpush1.bf16.msra.mxu0 %v856
          %986 = vmatprep.subr.bf16.mxu0 0
          %987 = vmatpush1.bf16.msra.mxu0 %v859
          %988 = vmatprep.subr.bf16.mxu0 0
          %989 = vmatpush1.bf16.msra.mxu0 %v862
          %990 = vmatprep.subr.bf16.mxu0 0
          %991 = vmatpush1.bf16.msra.mxu0 %v865
          %992 = vmatprep.subr.bf16.mxu0 0
          %993 = vmatpush1.bf16.msra.mxu0 %v868
          %994 = vmatprep.subr.bf16.mxu0 0
          %995 = vmatpush1.bf16.msra.mxu0 %v871
          %996 = vmatprep.subr.bf16.mxu0 0
          %997 = vmatpush1.bf16.msra.mxu0 %v874
          %998 = vmatprep.subr.bf16.mxu0 0
          %999 = vmatpush1.bf16.msra.mxu0 %v877
          %1000 = vmatprep.subr.bf16.mxu0 0
          %1001 = vmatpush1.bf16.msra.mxu0 %v880
          %1002 = vmatprep.mubr.bf16.mxu0 %v670
          %1003 = vmatmul.mubr.bf16.gmra.mrb[0].mxu0 %v669
          %v1004 = vpop.f32.mrb[0].mxu0
          %v1005 = vadd.f32 0.0, %v1004
          %v1006 = vpop.f32.mrb[0].mxu0
          %v1007 = vpop.f32.mrb[0].mxu0
          %v1008 = vpop.f32.mrb[0].mxu0
          %1009 = vdwg.mxu0
          %v1010 = vpack.c.bf16 %v964, %v555
          %v1011 = vpack.c.bf16 %v966, %v557
          %v1012 = vpack.c.bf16 %v1005, %v596
          %1016 = vrot.lane.b32.xlu0 %v1010, 127
          %v1017 = vpop.permute.xlu0 %1016
          %1018 = vrot.lane.b32.xlu0 %v1011, 127
          %v1019 = vpop.permute.xlu0 %1018
          %1020 = vrot.lane.b32.xlu0 %v1012, 127
          %v1021 = vpop.permute.xlu0 %1020
          %vm1022 = vcmask 1039360
          %v1023 = vsel %vm1022, %v1017, %v1019
          %v1024 = vsel %vm1022, %v1019, %v1021
          %1027 = vrot.lane.b32.xlu0 %v1010, 126
          %v1028 = vpop.permute.xlu0 %1027
          %1029 = vrot.lane.b32.xlu0 %v1011, 126
          %v1030 = vpop.permute.xlu0 %1029
          %1031 = vrot.lane.b32.xlu0 %v1012, 126
          %v1032 = vpop.permute.xlu0 %1031
          %vm1033 = vcmask 1031168
          %v1034 = vsel %vm1033, %v1028, %v1030
          %v1035 = vsel %vm1033, %v1030, %v1032
          %1038 = vrot.lane.b32.xlu0 %v1010, 110
          %v1039 = vpop.permute.xlu0 %1038
          %1040 = vrot.lane.b32.xlu0 %v1011, 110
          %v1041 = vpop.permute.xlu0 %1040
          %1042 = vrot.lane.b32.xlu0 %v1012, 110
          %v1043 = vpop.permute.xlu0 %1042
          %vm1044 = vcmask 900096
          %v1045 = vsel %vm1044, %v1039, %v1041
          %v1046 = vsel %vm1044, %v1041, %v1043
          %1049 = vrot.lane.b32.xlu0 %v1010, 109
          %v1050 = vpop.permute.xlu0 %1049
          %1051 = vrot.lane.b32.xlu0 %v1011, 109
          %v1052 = vpop.permute.xlu0 %1051
          %1053 = vrot.lane.b32.xlu0 %v1012, 109
          %v1054 = vpop.permute.xlu0 %1053
          %vm1055 = vcmask 891904
          %v1056 = vsel %vm1055, %v1050, %v1052
          %v1057 = vsel %vm1055, %v1052, %v1054
          %1060 = vrot.lane.b32.xlu0 %v1010, 108
          %v1061 = vpop.permute.xlu0 %1060
          %1062 = vrot.lane.b32.xlu0 %v1011, 108
          %v1063 = vpop.permute.xlu0 %1062
          %1064 = vrot.lane.b32.xlu0 %v1012, 108
          %v1065 = vpop.permute.xlu0 %1064
          %vm1066 = vcmask 883712
          %v1067 = vsel %vm1066, %v1061, %v1063
          %v1068 = vsel %vm1066, %v1063, %v1065
          %1071 = vrot.lane.b32.xlu0 %v1010, 92
          %v1072 = vpop.permute.xlu0 %1071
          %1073 = vrot.lane.b32.xlu0 %v1011, 92
          %v1074 = vpop.permute.xlu0 %1073
          %1075 = vrot.lane.b32.xlu0 %v1012, 92
          %v1076 = vpop.permute.xlu0 %1075
          %vm1077 = vcmask 752640
          %v1078 = vsel %vm1077, %v1072, %v1074
          %v1079 = vsel %vm1077, %v1074, %v1076
          %1082 = vrot.lane.b32.xlu0 %v1010, 91
          %v1083 = vpop.permute.xlu0 %1082
          %1084 = vrot.lane.b32.xlu0 %v1011, 91
          %v1085 = vpop.permute.xlu0 %1084
          %1086 = vrot.lane.b32.xlu0 %v1012, 91
          %v1087 = vpop.permute.xlu0 %1086
          %vm1088 = vcmask 744448
          %v1089 = vsel %vm1088, %v1083, %v1085
          %v1090 = vsel %vm1088, %v1085, %v1087
          %1093 = vrot.lane.b32.xlu0 %v1010, 90
          %v1094 = vpop.permute.xlu0 %1093
          %1095 = vrot.lane.b32.xlu0 %v1011, 90
          %v1096 = vpop.permute.xlu0 %1095
          %1097 = vrot.lane.b32.xlu0 %v1012, 90
          %v1098 = vpop.permute.xlu0 %1097
          %vm1099 = vcmask 736256
          %v1100 = vsel %vm1099, %v1094, %v1096
          %v1101 = vsel %vm1099, %v1096, %v1098
          %v1104 = vld [vmem:[%s5] sm:$0xff]
          %v1105 = vld [vmem:[%s5 + $0x8] sm:$0xff]
          %v1106 = vld [vmem:[%s5 + $0x10] sm:$0xff]
          %v1107 = vld [vmem:[%s5 + $0x18] sm:$0xff]
          %v1108 = vld [vmem:[%s5 + $0x20] sm:$0xff]
          %v1109 = vld [vmem:[%s5 + $0x28] sm:$0xff]
          %v1110 = vld [vmem:[%s5 + $0x30] sm:$0xff]
          %v1111 = vld [vmem:[%s5 + $0x38] sm:$0xff]
          %v1112 = vld [vmem:[%s5 + $0x40] sm:$0xff]
          %v1113 = vld [vmem:[%s5 + $0x48] sm:$0xff]
          %v1114 = vld [vmem:[%s5 + $0x50] sm:$0xff]
          %v1115 = vld [vmem:[%s5 + $0x58] sm:$0xff]
          %v1116 = vld [vmem:[%s5 + $0x60] sm:$0xff]
          %v1117 = vld [vmem:[%s5 + $0x68] sm:$0xff]
          %v1118 = vld [vmem:[%s5 + $0x70] sm:$0xff]
          %v1119 = vld [vmem:[%s5 + $0x78] sm:$0xff]
          %v1120 = vld [vmem:[%s5 + $0x80] sm:$0xff]
          %v1121 = vld [vmem:[%s5 + $0x88] sm:$0xff]
          %v1122 = vld [vmem:[%s5 + $0x90] sm:$0xff]
          %v1123 = vld [vmem:[%s5 + $0x98] sm:$0xff]
          %v1124 = vld [vmem:[%s5 + $0xa0] sm:$0xff]
          %v1125 = vld [vmem:[%s5 + $0xa8] sm:$0xff]
          %v1126 = vld [vmem:[%s5 + $0xb0] sm:$0xff]
          %v1127 = vld [vmem:[%s5 + $0xb8] sm:$0xff]
          %v1128 = vld [vmem:[%s5 + $0xc0] sm:$0xff]
          %v1129 = vld [vmem:[%s5 + $0xc8] sm:$0xff]
          %v1130 = vld [vmem:[%s5 + $0xd0] sm:$0xff]
          %v1131 = vld [vmem:[%s5 + $0xd8] sm:$0xff]
          %v1132 = vld [vmem:[%s5 + $0xe0] sm:$0xff]
          %v1133 = vld [vmem:[%s5 + $0xe8] sm:$0xff]
          %v1134 = vld [vmem:[%s5 + $0xf0] sm:$0xff]
          %v1135 = vld [vmem:[%s5 + $0xf8] sm:$0xff]
          %v1136 = vld [vmem:[%s5 + $0x100] sm:$0xff]
          %v1137 = vld [vmem:[%s5 + $0x108] sm:$0xff]
          %v1138 = vld [vmem:[%s5 + $0x110] sm:$0xff]
          %v1139 = vld [vmem:[%s5 + $0x118] sm:$0xff]
          %v1176 = vunpack.c.l.b16 %v1104
          %v1177 = vunpack.c.h.b16 %v1104
          %v1178 = vunpack.c.l.b16 %v1105
          %v1179 = vunpack.c.h.b16 %v1105
          %v1180 = vunpack.c.l.b16 %v1106
          %v1181 = vunpack.c.h.b16 %v1106
          %v1182 = vunpack.c.l.b16 %v1107
          %v1183 = vunpack.c.h.b16 %v1107
          %v1184 = vunpack.c.l.b16 %v1108
          %v1185 = vunpack.c.h.b16 %v1108
          %v1186 = vunpack.c.l.b16 %v1109
          %v1187 = vunpack.c.h.b16 %v1109
          %v1188 = vunpack.c.l.b16 %v1110
          %v1189 = vunpack.c.h.b16 %v1110
          %v1190 = vunpack.c.l.b16 %v1111
          %v1191 = vunpack.c.h.b16 %v1111
          %v1192 = vunpack.c.l.b16 %v1112
          %v1193 = vunpack.c.h.b16 %v1112
          %v1194 = vunpack.c.l.b16 %v1113
          %v1195 = vunpack.c.h.b16 %v1113
          %v1196 = vunpack.c.l.b16 %v1114
          %v1197 = vunpack.c.h.b16 %v1114
          %v1198 = vunpack.c.l.b16 %v1115
          %v1199 = vunpack.c.h.b16 %v1115
          %v1200 = vunpack.c.l.b16 %v1116
          %v1201 = vunpack.c.h.b16 %v1116
          %v1202 = vunpack.c.l.b16 %v1117
          %v1203 = vunpack.c.h.b16 %v1117
          %v1204 = vunpack.c.l.b16 %v1118
          %v1205 = vunpack.c.h.b16 %v1118
          %v1206 = vunpack.c.l.b16 %v1119
          %v1207 = vunpack.c.h.b16 %v1119
          %v1208 = vunpack.c.l.b16 %v1120
          %v1209 = vunpack.c.h.b16 %v1120
          %v1210 = vunpack.c.l.b16 %v1121
          %v1211 = vunpack.c.h.b16 %v1121
          %v1212 = vunpack.c.l.b16 %v1122
          %v1213 = vunpack.c.h.b16 %v1122
          %v1214 = vunpack.c.l.b16 %v1123
          %v1215 = vunpack.c.h.b16 %v1123
          %v1216 = vunpack.c.l.b16 %v1124
          %v1217 = vunpack.c.h.b16 %v1124
          %v1218 = vunpack.c.l.b16 %v1125
          %v1219 = vunpack.c.h.b16 %v1125
          %v1220 = vunpack.c.l.b16 %v1126
          %v1221 = vunpack.c.h.b16 %v1126
          %v1222 = vunpack.c.l.b16 %v1127
          %v1223 = vunpack.c.h.b16 %v1127
          %v1224 = vunpack.c.l.b16 %v1128
          %v1225 = vunpack.c.h.b16 %v1128
          %v1226 = vunpack.c.l.b16 %v1129
          %v1227 = vunpack.c.h.b16 %v1129
          %v1228 = vunpack.c.l.b16 %v1130
          %v1229 = vunpack.c.h.b16 %v1130
          %v1230 = vunpack.c.l.b16 %v1131
          %v1231 = vunpack.c.h.b16 %v1131
          %v1232 = vunpack.c.l.b16 %v1132
          %v1233 = vunpack.c.h.b16 %v1132
          %v1234 = vunpack.c.l.b16 %v1133
          %v1235 = vunpack.c.h.b16 %v1133
          %v1236 = vunpack.c.l.b16 %v1134
          %v1237 = vunpack.c.h.b16 %v1134
          %v1238 = vunpack.c.l.b16 %v1135
          %v1239 = vunpack.c.h.b16 %v1135
          %v1240 = vunpack.c.l.b16 %v1136
          %v1241 = vunpack.c.h.b16 %v1136
          %v1242 = vunpack.c.l.b16 %v1137
          %v1243 = vunpack.c.h.b16 %v1137
          %v1244 = vunpack.c.l.b16 %v1138
          %v1245 = vunpack.c.h.b16 %v1138
          %v1246 = vunpack.c.l.b16 %v1139
          %v1247 = vunpack.c.h.b16 %v1139
          %v1248 = vpack.c.b16 %v1178, %v1176
          %v1249 = vpack.c.b16 %v1179, %v1177
          %v1250 = vpack.c.b16 %v1182, %v1180
          %v1251 = vpack.c.b16 %v1183, %v1181
          %v1252 = vpack.c.b16 %v1186, %v1184
          %v1253 = vpack.c.b16 %v1187, %v1185
          %v1254 = vpack.c.b16 %v1190, %v1188
          %v1255 = vpack.c.b16 %v1191, %v1189
          %v1256 = vpack.c.b16 %v1194, %v1192
          %v1257 = vpack.c.b16 %v1195, %v1193
          %v1258 = vpack.c.b16 %v1198, %v1196
          %v1259 = vpack.c.b16 %v1199, %v1197
          %v1260 = vpack.c.b16 %v1202, %v1200
          %v1261 = vpack.c.b16 %v1203, %v1201
          %v1262 = vpack.c.b16 %v1206, %v1204
          %v1263 = vpack.c.b16 %v1207, %v1205
          %v1264 = vpack.c.b16 %v1210, %v1208
          %v1265 = vpack.c.b16 %v1211, %v1209
          %v1266 = vpack.c.b16 %v1214, %v1212
          %v1267 = vpack.c.b16 %v1215, %v1213
          %v1268 = vpack.c.b16 %v1218, %v1216
          %v1269 = vpack.c.b16 %v1219, %v1217
          %v1270 = vpack.c.b16 %v1222, %v1220
          %v1271 = vpack.c.b16 %v1223, %v1221
          %v1272 = vpack.c.b16 %v1226, %v1224
          %v1273 = vpack.c.b16 %v1227, %v1225
          %v1274 = vpack.c.b16 %v1230, %v1228
          %v1275 = vpack.c.b16 %v1231, %v1229
          %v1276 = vpack.c.b16 %v1234, %v1232
          %v1277 = vpack.c.b16 %v1235, %v1233
          %v1278 = vpack.c.b16 %v1238, %v1236
          %v1279 = vpack.c.b16 %v1239, %v1237
          %v1280 = vpack.c.b16 %v1242, %v1240
          %v1281 = vpack.c.b16 %v1243, %v1241
          %v1282 = vpack.c.b16 %v1246, %v1244
          %v1283 = vpack.c.b16 %v1247, %v1245
          %vm1320 = vcmask 261120
          %v1322 = vsel %vm1320, %v1012, 0
          %v1325 = vsel %vm1320, %v1021, 0
          %v1328 = vsel %vm1320, %v1032, 0
          %v1331 = vsel %vm1320, %v1043, 0
          %v1334 = vsel %vm1320, %v1054, 0
          %v1337 = vsel %vm1320, %v1065, 0
          %v1340 = vsel %vm1320, %v1076, 0
          %v1343 = vsel %vm1320, %v1087, 0
          %v1346 = vsel %vm1320, %v1098, 0
          %1348 = vmatprep.subr.bf16.mxu0 %v1249
          %1349 = vmatpush1.bf16.msra.mxu0 %v1248
          %1350 = vmatprep.subr.bf16.mxu0 %v1251
          %1351 = vmatpush1.bf16.msra.mxu0 %v1250
          %1352 = vmatprep.subr.bf16.mxu0 %v1253
          %1353 = vmatpush1.bf16.msra.mxu0 %v1252
          %1354 = vmatprep.subr.bf16.mxu0 %v1255
          %1355 = vmatpush1.bf16.msra.mxu0 %v1254
          %1356 = vmatprep.subr.bf16.mxu0 %v1257
          %1357 = vmatpush1.bf16.msra.mxu0 %v1256
          %1358 = vmatprep.subr.bf16.mxu0 %v1259
          %1359 = vmatpush1.bf16.msra.mxu0 %v1258
          %1360 = vmatprep.subr.bf16.mxu0 %v1261
          %1361 = vmatpush1.bf16.msra.mxu0 %v1260
          %1362 = vmatprep.subr.bf16.mxu0 %v1263
          %1363 = vmatpush1.bf16.msra.mxu0 %v1262
          %1364 = vmatprep.subr.bf16.mxu0 %v1265
          %1365 = vmatpush1.bf16.msra.mxu0 %v1264
          %1366 = vmatprep.subr.bf16.mxu0 %v1267
          %1367 = vmatpush1.bf16.msra.mxu0 %v1266
          %1368 = vmatprep.subr.bf16.mxu0 %v1269
          %1369 = vmatpush1.bf16.msra.mxu0 %v1268
          %1370 = vmatprep.subr.bf16.mxu0 %v1271
          %1371 = vmatpush1.bf16.msra.mxu0 %v1270
          %1372 = vmatprep.subr.bf16.mxu0 %v1273
          %1373 = vmatpush1.bf16.msra.mxu0 %v1272
          %1374 = vmatprep.subr.bf16.mxu0 %v1275
          %1375 = vmatpush1.bf16.msra.mxu0 %v1274
          %1376 = vmatprep.subr.bf16.mxu0 %v1277
          %1377 = vmatpush1.bf16.msra.mxu0 %v1276
          %1378 = vmatprep.subr.bf16.mxu0 %v1279
          %1379 = vmatpush1.bf16.msra.mxu0 %v1278
          %1380 = vmatprep.mubr.bf16.mxu0 %v1011
          %1381 = vmatmul.mubr.bf16.gmra.mrb[0].mxu0 %v1010
          %v1382 = vpop.f32.mrb[0].mxu0
          %v1383 = vadd.f32 0.0, %v1382
          %v1384 = vpop.f32.mrb[0].mxu0
          %v1385 = vadd.f32 0.0, %v1384
          %v1386 = vpop.f32.mrb[0].mxu0
          %v1387 = vadd.f32 0.0, %v1386
          %v1388 = vpop.f32.mrb[0].mxu0
          %v1389 = vadd.f32 0.0, %v1388
          %1390 = vmatprep.mubr.bf16.mxu0 %v1024
          %1391 = vmatmul.mubr.bf16.gmra.mrb[0].mxu0 %v1023
          %v1392 = vpop.f32.mrb[0].mxu0
          %v1393 = vadd.f32 0.0, %v1392
          %v1394 = vpop.f32.mrb[0].mxu0
          %v1395 = vadd.f32 0.0, %v1394
          %v1396 = vpop.f32.mrb[0].mxu0
          %v1397 = vadd.f32 0.0, %v1396
          %v1398 = vpop.f32.mrb[0].mxu0
          %v1399 = vadd.f32 0.0, %v1398
          %1400 = vmatprep.mubr.bf16.mxu0 %v1035
          %1401 = vmatmul.mubr.bf16.gmra.mrb[0].mxu0 %v1034
          %v1402 = vpop.f32.mrb[0].mxu0
          %v1403 = vadd.f32 0.0, %v1402
          %v1404 = vpop.f32.mrb[0].mxu0
          %v1405 = vadd.f32 0.0, %v1404
          %v1406 = vpop.f32.mrb[0].mxu0
          %v1407 = vadd.f32 0.0, %v1406
          %v1408 = vpop.f32.mrb[0].mxu0
          %v1409 = vadd.f32 0.0, %v1408
          %1410 = vmatprep.mubr.bf16.mxu0 %v1046
          %1411 = vmatmul.mubr.bf16.gmra.mrb[0].mxu0 %v1045
          %v1412 = vpop.f32.mrb[0].mxu0
          %v1413 = vadd.f32 0.0, %v1412
          %v1414 = vpop.f32.mrb[0].mxu0
          %v1415 = vadd.f32 0.0, %v1414
          %v1416 = vpop.f32.mrb[0].mxu0
          %v1417 = vadd.f32 0.0, %v1416
          %v1418 = vpop.f32.mrb[0].mxu0
          %v1419 = vadd.f32 0.0, %v1418
          %1420 = vmatprep.mubr.bf16.mxu0 %v1057
          %1421 = vmatmul.mubr.bf16.gmra.mrb[0].mxu0 %v1056
          %v1422 = vpop.f32.mrb[0].mxu0
          %v1423 = vadd.f32 0.0, %v1422
          %v1424 = vpop.f32.mrb[0].mxu0
          %v1425 = vadd.f32 0.0, %v1424
          %v1426 = vpop.f32.mrb[0].mxu0
          %v1427 = vadd.f32 0.0, %v1426
          %v1428 = vpop.f32.mrb[0].mxu0
          %v1429 = vadd.f32 0.0, %v1428
          %1430 = vmatprep.mubr.bf16.mxu0 %v1068
          %1431 = vmatmul.mubr.bf16.gmra.mrb[0].mxu0 %v1067
          %v1432 = vpop.f32.mrb[0].mxu0
          %v1433 = vadd.f32 0.0, %v1432
          %v1434 = vpop.f32.mrb[0].mxu0
          %v1435 = vadd.f32 0.0, %v1434
          %v1436 = vpop.f32.mrb[0].mxu0
          %v1437 = vadd.f32 0.0, %v1436
          %v1438 = vpop.f32.mrb[0].mxu0
          %v1439 = vadd.f32 0.0, %v1438
          %1440 = vmatprep.mubr.bf16.mxu0 %v1079
          %1441 = vmatmul.mubr.bf16.gmra.mrb[0].mxu0 %v1078
          %v1442 = vpop.f32.mrb[0].mxu0
          %v1443 = vadd.f32 0.0, %v1442
          %v1444 = vpop.f32.mrb[0].mxu0
          %v1445 = vadd.f32 0.0, %v1444
          %v1446 = vpop.f32.mrb[0].mxu0
          %v1447 = vadd.f32 0.0, %v1446
          %v1448 = vpop.f32.mrb[0].mxu0
          %v1449 = vadd.f32 0.0, %v1448
          %1450 = vmatprep.mubr.bf16.mxu0 %v1090
          %1451 = vmatmul.mubr.bf16.gmra.mrb[0].mxu0 %v1089
          %v1452 = vpop.f32.mrb[0].mxu0
          %v1453 = vadd.f32 0.0, %v1452
          %v1454 = vpop.f32.mrb[0].mxu0
          %v1455 = vadd.f32 0.0, %v1454
          %v1456 = vpop.f32.mrb[0].mxu0
          %v1457 = vadd.f32 0.0, %v1456
          %v1458 = vpop.f32.mrb[0].mxu0
          %v1459 = vadd.f32 0.0, %v1458
          %1460 = vmatprep.mubr.bf16.mxu0 %v1101
          %1461 = vmatmul.mubr.bf16.gmra.mrb[0].mxu0 %v1100
          %v1462 = vpop.f32.mrb[0].mxu0
          %v1463 = vadd.f32 0.0, %v1462
          %v1464 = vpop.f32.mrb[0].mxu0
          %v1465 = vadd.f32 0.0, %v1464
          %v1466 = vpop.f32.mrb[0].mxu0
          %v1467 = vadd.f32 0.0, %v1466
          %v1468 = vpop.f32.mrb[0].mxu0
          %v1469 = vadd.f32 0.0, %v1468
          %1470 = vdwg.mxu0
          %1471 = vmatprep.subr.bf16.mxu0 %v1281
          %1472 = vmatpush1.bf16.msra.mxu0 %v1280
          %1473 = vmatprep.subr.bf16.mxu0 %v1283
          %1474 = vmatpush1.bf16.msra.mxu0 %v1282
          %1475 = vmatprep.subr.bf16.mxu0 0
          %1476 = vmatpush1.bf16.msra.mxu0 0
          %1477 = vmatprep.subr.bf16.mxu0 0
          %1478 = vmatpush1.bf16.msra.mxu0 0
          %1479 = vmatprep.subr.bf16.mxu0 0
          %1480 = vmatpush1.bf16.msra.mxu0 0
          %1481 = vmatprep.subr.bf16.mxu0 0
          %1482 = vmatpush1.bf16.msra.mxu0 0
          %1483 = vmatprep.subr.bf16.mxu0 0
          %1484 = vmatpush1.bf16.msra.mxu0 0
          %1485 = vmatprep.subr.bf16.mxu0 0
          %1486 = vmatpush1.bf16.msra.mxu0 0
          %1487 = vmatprep.subr.bf16.mxu0 0
          %1488 = vmatpush1.bf16.msra.mxu0 0
          %1489 = vmatprep.subr.bf16.mxu0 0
          %1490 = vmatpush1.bf16.msra.mxu0 0
          %1491 = vmatprep.subr.bf16.mxu0 0
          %1492 = vmatpush1.bf16.msra.mxu0 0
          %1493 = vmatprep.subr.bf16.mxu0 0
          %1494 = vmatpush1.bf16.msra.mxu0 0
          %1495 = vmatprep.subr.bf16.mxu0 0
          %1496 = vmatpush1.bf16.msra.mxu0 0
          %1497 = vmatprep.subr.bf16.mxu0 0
          %1498 = vmatpush1.bf16.msra.mxu0 0
          %1499 = vmatprep.subr.bf16.mxu0 0
          %1500 = vmatpush1.bf16.msra.mxu0 0
          %1501 = vmatprep.subr.bf16.mxu0 0
          %1502 = vmatpush1.bf16.msra.mxu0 0
          %1503 = vmatprep.mubr.bf16.mxu0 0
          %1504 = vmatmul.mubr.bf16.gmra.mrb[0].mxu0 %v1322
          %v1505 = vpop.f32.mrb[0].mxu0
          %v1506 = vadd.f32 %v1383, %v1505
          %v1507 = vpop.f32.mrb[0].mxu0
          %v1508 = vadd.f32 %v1385, %v1507
          %v1509 = vpop.f32.mrb[0].mxu0
          %v1510 = vadd.f32 %v1387, %v1509
          %v1511 = vpop.f32.mrb[0].mxu0
          %v1512 = vadd.f32 %v1389, %v1511
          %1513 = vmatprep.mubr.bf16.mxu0 0
          %1514 = vmatmul.mubr.bf16.gmra.mrb[0].mxu0 %v1325
          %v1515 = vpop.f32.mrb[0].mxu0
          %v1516 = vadd.f32 %v1393, %v1515
          %v1517 = vpop.f32.mrb[0].mxu0
          %v1518 = vadd.f32 %v1395, %v1517
          %v1519 = vpop.f32.mrb[0].mxu0
          %v1520 = vadd.f32 %v1397, %v1519
          %v1521 = vpop.f32.mrb[0].mxu0
          %v1522 = vadd.f32 %v1399, %v1521
          %1523 = vmatprep.mubr.bf16.mxu0 0
          %1524 = vmatmul.mubr.bf16.gmra.mrb[0].mxu0 %v1328
          %v1525 = vpop.f32.mrb[0].mxu0
          %v1526 = vadd.f32 %v1403, %v1525
          %v1527 = vpop.f32.mrb[0].mxu0
          %v1528 = vadd.f32 %v1405, %v1527
          %v1529 = vpop.f32.mrb[0].mxu0
          %v1530 = vadd.f32 %v1407, %v1529
          %v1531 = vpop.f32.mrb[0].mxu0
          %v1532 = vadd.f32 %v1409, %v1531
          %1533 = vmatprep.mubr.bf16.mxu0 0
          %1534 = vmatmul.mubr.bf16.gmra.mrb[0].mxu0 %v1331
          %v1535 = vpop.f32.mrb[0].mxu0
          %v1536 = vadd.f32 %v1413, %v1535
          %v1537 = vpop.f32.mrb[0].mxu0
          %v1538 = vadd.f32 %v1415, %v1537
          %v1539 = vpop.f32.mrb[0].mxu0
          %v1540 = vadd.f32 %v1417, %v1539
          %v1541 = vpop.f32.mrb[0].mxu0
          %v1542 = vadd.f32 %v1419, %v1541
          %1543 = vmatprep.mubr.bf16.mxu0 0
          %1544 = vmatmul.mubr.bf16.gmra.mrb[0].mxu0 %v1334
          %v1545 = vpop.f32.mrb[0].mxu0
          %v1546 = vadd.f32 %v1423, %v1545
          %v1547 = vpop.f32.mrb[0].mxu0
          %v1548 = vadd.f32 %v1425, %v1547
          %v1549 = vpop.f32.mrb[0].mxu0
          %v1550 = vadd.f32 %v1427, %v1549
          %v1551 = vpop.f32.mrb[0].mxu0
          %v1552 = vadd.f32 %v1429, %v1551
          %1553 = vmatprep.mubr.bf16.mxu0 0
          %1554 = vmatmul.mubr.bf16.gmra.mrb[0].mxu0 %v1337
          %v1555 = vpop.f32.mrb[0].mxu0
          %v1556 = vadd.f32 %v1433, %v1555
          %v1557 = vpop.f32.mrb[0].mxu0
          %v1558 = vadd.f32 %v1435, %v1557
          %v1559 = vpop.f32.mrb[0].mxu0
          %v1560 = vadd.f32 %v1437, %v1559
          %v1561 = vpop.f32.mrb[0].mxu0
          %v1562 = vadd.f32 %v1439, %v1561
          %1563 = vmatprep.mubr.bf16.mxu0 0
          %1564 = vmatmul.mubr.bf16.gmra.mrb[0].mxu0 %v1340
          %v1565 = vpop.f32.mrb[0].mxu0
          %v1566 = vadd.f32 %v1443, %v1565
          %v1567 = vpop.f32.mrb[0].mxu0
          %v1568 = vadd.f32 %v1445, %v1567
          %v1569 = vpop.f32.mrb[0].mxu0
          %v1570 = vadd.f32 %v1447, %v1569
          %v1571 = vpop.f32.mrb[0].mxu0
          %v1572 = vadd.f32 %v1449, %v1571
          %1573 = vmatprep.mubr.bf16.mxu0 0
          %1574 = vmatmul.mubr.bf16.gmra.mrb[0].mxu0 %v1343
          %v1575 = vpop.f32.mrb[0].mxu0
          %v1576 = vadd.f32 %v1453, %v1575
          %v1577 = vpop.f32.mrb[0].mxu0
          %v1578 = vadd.f32 %v1455, %v1577
          %v1579 = vpop.f32.mrb[0].mxu0
          %v1580 = vadd.f32 %v1457, %v1579
          %v1581 = vpop.f32.mrb[0].mxu0
          %v1582 = vadd.f32 %v1459, %v1581
          %1583 = vmatprep.mubr.bf16.mxu0 0
          %1584 = vmatmul.mubr.bf16.gmra.mrb[0].mxu0 %v1346
          %v1585 = vpop.f32.mrb[0].mxu0
          %v1586 = vadd.f32 %v1463, %v1585
          %v1587 = vpop.f32.mrb[0].mxu0
          %v1588 = vadd.f32 %v1465, %v1587
          %v1589 = vpop.f32.mrb[0].mxu0
          %v1590 = vadd.f32 %v1467, %v1589
          %v1591 = vpop.f32.mrb[0].mxu0
          %v1592 = vadd.f32 %v1469, %v1591
          %1593 = vdwg.mxu0
          %v1594 = vpack.c.bf16 %v1510, %v1506
          %v1595 = vpack.c.bf16 %v1512, %v1508
          %v1596 = vpack.c.bf16 %v1520, %v1516
          %v1597 = vpack.c.bf16 %v1522, %v1518
          %v1598 = vpack.c.bf16 %v1530, %v1526
          %v1599 = vpack.c.bf16 %v1532, %v1528
          %v1600 = vpack.c.bf16 %v1540, %v1536
          %v1601 = vpack.c.bf16 %v1542, %v1538
          %v1602 = vpack.c.bf16 %v1550, %v1546
          %v1603 = vpack.c.bf16 %v1552, %v1548
          %v1604 = vpack.c.bf16 %v1560, %v1556
          %v1605 = vpack.c.bf16 %v1562, %v1558
          %v1606 = vpack.c.bf16 %v1570, %v1566
          %v1607 = vpack.c.bf16 %v1572, %v1568
          %v1608 = vpack.c.bf16 %v1580, %v1576
          %v1609 = vpack.c.bf16 %v1582, %v1578
          %v1610 = vpack.c.bf16 %v1590, %v1586
          %v1611 = vpack.c.bf16 %v1592, %v1588
          %v1612 = vld [vmem:[%s6] sm:$0xff]
          %v1613 = vld [vmem:[%s6 + $0x8] sm:$0xff]
          %v1616 = vunpack.c.l.b16 %v1612
          %v1617 = vunpack.c.h.b16 %v1612
          %v1618 = vunpack.c.l.b16 %v1613
          %v1619 = vunpack.c.h.b16 %v1613
          %v1620 = vpack.c.b16 %v1618, %v1616
          %v1621 = vpack.c.b16 %v1619, %v1617
          %v1624 = vsel %vm391, %v1621, 0
          %1626 = vmatprep.subr.bf16.mxu0 %v1595
          %1627 = vmatpush1.bf16.msra.mxu0 %v1594
          %1628 = vmatprep.subr.bf16.mxu0 %v1597
          %1629 = vmatpush1.bf16.msra.mxu0 %v1596
          %1630 = vmatprep.subr.bf16.mxu0 %v1599
          %1631 = vmatpush1.bf16.msra.mxu0 %v1598
          %1632 = vmatprep.subr.bf16.mxu0 %v1601
          %1633 = vmatpush1.bf16.msra.mxu0 %v1600
          %1634 = vmatprep.subr.bf16.mxu0 %v1603
          %1635 = vmatpush1.bf16.msra.mxu0 %v1602
          %1636 = vmatprep.subr.bf16.mxu0 %v1605
          %1637 = vmatpush1.bf16.msra.mxu0 %v1604
          %1638 = vmatprep.subr.bf16.mxu0 %v1607
          %1639 = vmatpush1.bf16.msra.mxu0 %v1606
          %1640 = vmatprep.subr.bf16.mxu0 %v1609
          %1641 = vmatpush1.bf16.msra.mxu0 %v1608
          %1642 = vmatprep.subr.bf16.mxu0 %v1611
          %1643 = vmatpush1.bf16.msra.mxu0 %v1610
          %1644 = vmatprep.subr.bf16.mxu0 0
          %1645 = vmatpush1.bf16.msra.mxu0 0
          %1646 = vmatprep.subr.bf16.mxu0 0
          %1647 = vmatpush1.bf16.msra.mxu0 0
          %1648 = vmatprep.subr.bf16.mxu0 0
          %1649 = vmatpush1.bf16.msra.mxu0 0
          %1650 = vmatprep.subr.bf16.mxu0 0
          %1651 = vmatpush1.bf16.msra.mxu0 0
          %1652 = vmatprep.subr.bf16.mxu0 0
          %1653 = vmatpush1.bf16.msra.mxu0 0
          %1654 = vmatprep.subr.bf16.mxu0 0
          %1655 = vmatpush1.bf16.msra.mxu0 0
          %1656 = vmatprep.subr.bf16.mxu0 0
          %1657 = vmatpush1.bf16.msra.mxu0 0
          %1658 = vmatprep.mubr.bf16.mxu0 %v1624
          %1659 = vmatmul.mubr.bf16.gmra.mrb[0].mxu0 %v1620
          %v1660 = vpop.f32.mrb[0].mxu0
          %v1661 = vadd.f32 0.0, %v1660
          %v1662 = vpop.f32.mrb[0].mxu0
          %v1663 = vadd.f32 0.0, %v1662
          %v1664 = vpop.f32.mrb[0].mxu0
          %v1665 = vadd.f32 0.0, %v1664
          %v1666 = vpop.f32.mrb[0].mxu0
          %v1667 = vadd.f32 0.0, %v1666
          %1668 = vdwg.mxu0
          %s1669 = smul.u32 %s27, 4
          %s1670 = smul.addr %s1669, 8
          %s1671 = scalar_lea.vmem [#allocation2], %s1670
          %1672 = vst [vmem:[%s1671] sm:$0xff] %v1661
          %1673 = vst [vmem:[%s1671 + $0x8] sm:$0xff] %v1663
          %1674 = vst [vmem:[%s1671 + $0x10] sm:$0xff] %v1665
          %1675 = vst [vmem:[%s1671 + $0x18] sm:$0xff] %v1667
          %v1676 = vadd.f32 %v1661, %v1663
          %1677 = vadd.xlane.f32.xlu0 %v1676
          %v1678 = vpop.xlane.xlu0 %1677
          %v1679 = vadd.f32 %v1665, %v1667
          %1680 = vadd.xlane.f32.xlu0 %v1679
          %v1681 = vpop.xlane.xlu0 %1680
          %v1682 = vmul.f32 %v1661, %v1661
          %v1683 = vmul.f32 %v1663, %v1663
          %v1684 = vmul.f32 %v1665, %v1665
          %v1685 = vmul.f32 %v1667, %v1667
          %v1686 = vadd.f32 %v1682, %v1683
          %1687 = vadd.xlane.f32.xlu0 %v1686
          %v1688 = vpop.xlane.xlu0 %1687
          %v1689 = vadd.f32 %v1684, %v1685
          %1690 = vadd.xlane.f32.xlu0 %v1689
          %v1691 = vpop.xlane.xlu0 %1690
          %v1692 = vadd.f32 %v1678, %v1681
          %v1693 = vadd.f32 %v1688, %v1691
          %v1694 = vld [vmem:[#allocation3] sm:$0xff]
          %v1695 = vadd.f32 %v1694, %v1692
          %vm1696 = vcmask 7168
          %1697 = vst.msk [vmem:[#allocation3] sm:$0xff] %vm1696, %v1695
          %v1698 = vld [vmem:[#allocation4] sm:$0xff]
          %v1699 = vadd.f32 %v1698, %v1693
          %1700 = vst.msk [vmem:[#allocation4] sm:$0xff] %vm1696, %v1699
        $region56: #{tpu_custom_call.1} parent=51 // pred_fallthru
          _
        %p1701 = scmp.eq.s32.totalorder %s26, 1
        // Predicated region
        $region61: #{tpu_custom_call.1} parent=51 // pred_check
          %p1702 = pneg %p1701
        $region62: #{tpu_custom_call.1} parent=51 // pred_check_branch
          %1704 = sbr.rel (%p1702) target = $region64
        $region63: #{tpu_custom_call.1} parent=51 // pred_region
          %v1705 = vld [vmem:[#allocation3] sm:$0xff]
          %v1706 = vmul.f32 %v1705, 0.001953125
          %v1707 = vld [vmem:[#allocation4] sm:$0xff]
          %v1708 = vmul.f32 %v1707, 0.001953125
          %v1709 = vmul.f32 %v1706, %v1706
          %v1710 = vsub.f32 %v1708, %v1709
          %v1711 = vmax.f32 %v1710, 0.0
          %v1712 = vld [vmem:[%s7] sm:$0xff]
          %v1713 = vadd.f32 %v1711, 1e-05
          %v1714 = vrsqrt.pop %v1713
          %v1715 = vmul.f32 %v1712, %v1714
          %v1716 = vmul.f32 %v1706, %v1715
          %1718 = vrot.lane.b32.xlu0 %v1716, 1
          %v1719 = vpop.permute.xlu0 %1718
          %v1721 = vsub.f32 %v1712, %v1719
          %s1722 = smul.u32 %s27, 4
          %s1723 = smul.addr %s1722, 8
          %s1724 = scalar_lea.vmem [#allocation2], %s1723
          %v1725 = vld [vmem:[%s1724] sm:$0xff]
          %v1726 = vld [vmem:[%s1724 + $0x8] sm:$0xff]
          %v1727 = vld [vmem:[%s1724 + $0x10] sm:$0xff]
          %v1728 = vld [vmem:[%s1724 + $0x18] sm:$0xff]
          %1730 = vset.pattern.permute.xlu0 0
          %1731 = vperm.xlu0 %1730, %v1715
          %v1732 = vpop.permute.xlu0 %1731
          %v1734 = vmul.f32 %v1725, %v1732
          %v1735 = vmul.f32 %v1726, %v1732
          %v1736 = vmul.f32 %v1727, %v1732
          %v1737 = vmul.f32 %v1728, %v1732
          %1739 = vset.pattern.permute.xlu0 1
          %1740 = vperm.xlu0 %1739, %v1721
          %v1741 = vpop.permute.xlu0 %1740
          %v1743 = vadd.f32 %v1734, %v1741
          %v1744 = vadd.f32 %v1735, %v1741
          %v1745 = vadd.f32 %v1736, %v1741
          %v1746 = vadd.f32 %v1737, %v1741
          %v1747 = vmax.f32 %v1743, 0.0
          %v1748 = vmax.f32 %v1744, 0.0
          %v1749 = vmax.f32 %v1745, 0.0
          %v1750 = vmax.f32 %v1746, 0.0
          %1751 = vst [vmem:[%s348] sm:$0xff] %v1747
          %1752 = vst [vmem:[%s348 + $0x8] sm:$0xff] %v1748
          %1753 = vst [vmem:[%s348 + $0x10] sm:$0xff] %v1749
          %1754 = vst [vmem:[%s348 + $0x18] sm:$0xff] %v1750
        $region64: #{tpu_custom_call.1} parent=51 // pred_fallthru
          _
        %s1755 = sand.u32 %s230, 1
        %s1756 = scalar_lea.sflag [#allocation6], %s1755
        %s1757 = sand.u32 %s230, 1
        %s1758 = smul.addr %s1757, 32
        %s1759 = scalar_lea.vmem [#allocation5], %s1758
        // Predicated region
        $region65: #{tpu_custom_call.1} parent=51 // pred_check
          %p1760 = pneg %p240
        $region66: #{tpu_custom_call.1} parent=51 // pred_check_branch
          %1762 = sbr.rel (%p1760) target = $region68
        $region67: #{tpu_custom_call.1} parent=51 // pred_region
          %s1763 = smul.u32 %s26, %s27
          %s1764 = smul.u32 2, %s1763
          %s1766 = ssub.s32 512, 512
          %1767 = vsyncadd %s1756, %s1766
          %s1768 = smul.addr %s1764, 2
          %s1769 = smul.addr %s1768, 128
          %s1770 = scalar_lea.hbm %s8, %s1769
          %s1771 = sshll.u32 %s1759, 4
          %s1772 = int_to_ptr.vmem [resolvable:$true] %s1771
          %1777 = dma.vmem_to_hbm [thread:$0]  %s1772, 512, %s1770, %s1756, 256, 256, 16
        $region68: #{tpu_custom_call.1} parent=51 // pred_fallthru
          _
      $region52: #{tpu_custom_call.1} parent=5 // pred_fallthru
        _
      %p1778 = scmp.le.s32.totalorder 2, %s17
      // Predicated region
      $region69: #{tpu_custom_call.1} parent=5 // pred_check
        %p1779 = pneg %p1778
      $region70: #{tpu_custom_call.1} parent=5 // pred_check_branch
        %1781 = sbr.rel (%p1779) target = $region72
      $region71: #{tpu_custom_call.1} parent=5 // pred_region
        %s1782 = ssub.s32 %s17, 2
        // Predicated region
        $region73: #{tpu_custom_call.1} parent=71 // pred_check
          %p1783 = pneg %p246
        $region74: #{tpu_custom_call.1} parent=71 // pred_check_branch
          %1785 = sbr.rel (%p1783) target = $region76
        $region75: #{tpu_custom_call.1} parent=71 // pred_region
          %s1786 = sand.u32 %s231, 1
          %s1787 = scalar_lea.sflag [#allocation6], %s1786
          %s1788 = sand.u32 %s231, 1
          %s1789 = smul.addr %s1788, 32
          %s1790 = scalar_lea.vmem [#allocation5], %s1789
          %1791 = dma.done %s1787, 512
        $region76: #{tpu_custom_call.1} parent=71 // pred_fallthru
          _
      $region72: #{tpu_custom_call.1} parent=5 // pred_fallthru
        _
    $region6: #{tpu_custom_call.1} parent=1 // loop_footer
      %s21 = sadd.s32 1, %s17
    $region7: #{tpu_custom_call.1} parent=1 // loop_footer_branch
      %16 = sbr.rel target = $region3
    $region8: #{tpu_custom_call.1} parent=1 // loop_exit
      _
    %1792 = vsyncpa [#allocation6], 1
    %s1793 = scalar_lea.sflag [#allocation6], 1
    %1794 = vsyncpa %s1793, 1

</llo_original>
